<compile_context>
chip_gen: v7x
topology: tpu7x:2x2x1
jax: 0.10.0
libtpu: 0.0.40
codegen_flags: <defaults>
</compile_context>

<pallas_src>
import jax
import jax.numpy as jnp
from jax.experimental import pallas as pl
from jax.experimental.pallas import tpu as pltpu

# ---- model dims (match the PyTorch example: 3 nodes, 3-d features, 3-d target) ----
N_NODES = 3
INPUT_DIM = 3
HIDDEN_DIM = 32
OUTPUT_DIM = 3

# ---- TPU packing ----
NODES_PER_GRAPH = 8                                    # per-graph rows (sublane multiple)
GRAPHS_PER_TILE = 16                                   # 16 * 8 = 128 node rows per tile
TILES_PER_STEP = 2                                     # 2 tiles per grid step (fat steps)
GRAPHS_PER_STEP = GRAPHS_PER_TILE * TILES_PER_STEP     # 32 graphs / step
STEP_ROWS = GRAPHS_PER_STEP * NODES_PER_GRAPH          # 256 node rows / step
NUM_STEPS = 2          # exactly 2 "parallel" steps -> both TCs on v7x; near-free on v5e/v6e
BATCH = NUM_STEPS * GRAPHS_PER_STEP                    # 64 graphs per call

IN_PAD = 8                                             # padded input-feature dim
H_PAD = 128                                            # hidden padded to full lane width
OUT_PAD = 128                                          # lane-dense output slab width
SLAB_LANES = 256                                       # slab lane width (holds A_big/pool)

# parameter-slab row offsets (all multiples of 16 -> bf16 sublane-tile aligned)
_A_OFF = 0                                             # rows   0..255: block-diag A_hat (256,256)
_W1_OFF = _A_OFF + STEP_ROWS                           # rows 256..263: W1  (8,128)  [16 reserved]
_B_OFF = _W1_OFF + 16                                  # rows 272..279: bias rows    [16 reserved]
_B1_ROW, _B2_ROW, _BFC_ROW = 0, 1, 2                   # offsets inside the bias block
_W2_OFF = _B_OFF + 16                                  # rows 288..415: W2  (128,128)
_WFC_OFF = _W2_OFF + H_PAD                             # rows 416..543: Wfc (128,128)
_POOL_OFF = _WFC_OFF + H_PAD                           # rows 544..575: pool (32,256)
SLAB_ROWS = _POOL_OFF + GRAPHS_PER_STEP                # 576


def gnn_step_kernel(x_ref, w_ref, o_ref):
    f32 = jnp.float32
    bf16 = jnp.bfloat16

    x = x_ref[...]                                               # (256, 8)   bf16 node features
    a = w_ref[_A_OFF:_A_OFF + STEP_ROWS, :]                      # (256, 256) bf16 block-diag A_hat
    w1 = w_ref[_W1_OFF:_W1_OFF + IN_PAD, :H_PAD]                 # (8, 128)
    bias = w_ref[_B_OFF:_B_OFF + 8, :H_PAD].astype(f32)          # aligned (8,128) load
    b1 = bias[_B1_ROW:_B1_ROW + 1, :]                            # (1, 128)
    b2 = bias[_B2_ROW:_B2_ROW + 1, :]
    bfc = bias[_BFC_ROW:_BFC_ROW + 1, :]
    w2 = w_ref[_W2_OFF:_W2_OFF + H_PAD, :H_PAD]                  # (128, 128)
    wfc = w_ref[_WFC_OFF:_WFC_OFF + H_PAD, :H_PAD]               # (128, 128)
    pool = w_ref[_POOL_OFF:_POOL_OFF + GRAPHS_PER_STEP, :]       # (32, 256)

    # conv1 (reordered): H1 = relu(A @ (X @ W1) + b1)  -> lane-dense (256,128) intermediate
    xw = jnp.dot(x, w1, preferred_element_type=f32)                         # (256, 128)
    h1 = jnp.dot(a, xw.astype(bf16), preferred_element_type=f32) + b1       # (256, 128)
    h1 = jnp.maximum(h1, 0.0)

    # conv2: H2 = relu(A @ (H1 @ W2) + b2)
    hw = jnp.dot(h1.astype(bf16), w2, preferred_element_type=f32)           # (256, 128)
    h2 = jnp.dot(a, hw.astype(bf16), preferred_element_type=f32) + b2       # (256, 128)
    h2 = jnp.maximum(h2, 0.0)

    # per-graph mean-pool: one (32,256)@(256,128) MXU op with the precomputed pool matrix
    pooled = jnp.dot(pool, h2.astype(bf16), preferred_element_type=f32)     # (32, 128)

    # fc (lane-dense output slab; real outputs live in lanes 0..2)
    out = jnp.dot(pooled.astype(bf16), wfc, preferred_element_type=f32) + bfc
    o_ref[...] = out.astype(o_ref.dtype)


def gnn_regressor_forward(x_rows, slab):
    """x_rows: (BATCH*NODES_PER_GRAPH, IN_PAD) bf16; slab: (SLAB_ROWS, SLAB_LANES) bf16.
    Returns (BATCH, OUTPUT_DIM) f32."""
    # Unpadded (real model) FLOPs per graph, as advised by the perf review.
    flops_per_graph = (
        2 * N_NODES * INPUT_DIM * HIDDEN_DIM          # X @ W1
        + 2 * N_NODES * N_NODES * HIDDEN_DIM          # A @ (X W1)
        + 2 * N_NODES * HIDDEN_DIM * HIDDEN_DIM       # H1 @ W2
        + 2 * N_NODES * N_NODES * HIDDEN_DIM          # A @ (H1 W2)
        + 2 * N_NODES * HIDDEN_DIM                    # mean pool
        + 2 * HIDDEN_DIM * OUTPUT_DIM)                # fc
    bytes_accessed = slab.size * 2 + x_rows.size * 2 + BATCH * OUT_PAD * 4  # slab counted once

    out = pl.pallas_call(
        gnn_step_kernel,
        grid=(NUM_STEPS,),
        in_specs=[
            # per-step node-feature tile (tiny, streamed / double-buffered)
            pl.BlockSpec((STEP_ROWS, IN_PAD), lambda t: (t, 0)),
            # constant operand: whole parameter slab (A_hat + weights + pool) resident
            # in VMEM, copied once, single-buffered -> no per-step DMA bookkeeping.
            pl.BlockSpec(memory_space=pltpu.MemorySpace.VMEM),
        ],
        out_specs=pl.BlockSpec((GRAPHS_PER_STEP, OUT_PAD), lambda t: (t, 0)),
        out_shape=jax.ShapeDtypeStruct((BATCH, OUT_PAD), jnp.float32),
        compiler_params=pltpu.CompilerParams(
            dimension_semantics=("parallel",),      # 2 fat steps -> both TCs on v7x
            vmem_limit_bytes=8 << 20),
        cost_estimate=pl.CostEstimate(
            flops=int(BATCH * flops_per_graph),
            transcendentals=0,
            bytes_accessed=int(bytes_accessed)),
    )(x_rows, slab)
    return out[:, :OUTPUT_DIM]


def build_gcn_adj(edge_index, num_nodes):
    """Dense A_hat = D^-1/2 (A + I) D^-1/2 (PyG GCNConv gcn_norm)."""
    src, dst = edge_index[0], edge_index[1]
    a = jnp.zeros((num_nodes, num_nodes), jnp.float32).at[dst, src].add(1.0)
    a = a + jnp.eye(num_nodes, dtype=jnp.float32)
    deg = jnp.sum(a, axis=1)
    d_inv_sqrt = jnp.where(deg > 0, 1.0 / jnp.sqrt(jnp.maximum(deg, 1e-12)), 0.0)
    return d_inv_sqrt[:, None] * a * d_inv_sqrt[None, :]


def pack_inputs(node_features):
    """Padded node-feature rows (bf16), NODES_PER_GRAPH rows per graph."""
    x_pad = jnp.zeros((BATCH, NODES_PER_GRAPH, IN_PAD), jnp.float32)
    x_pad = x_pad.at[:, :N_NODES, :INPUT_DIM].set(node_features)
    x_rows = x_pad.reshape(BATCH * NODES_PER_GRAPH, IN_PAD)              # (512, 8)
    return x_rows.astype(jnp.bfloat16)


def pack_slab(a3, params):
    """Block-diag A_hat + all weights/biases + mean-pool matrix in one bf16 slab."""
    w1, b1, w2, b2, wfc, bfc = params
    slab = jnp.zeros((SLAB_ROWS, SLAB_LANES), jnp.float32)

    # block-diagonal A_hat for one fat step (GRAPHS_PER_STEP graphs x 8 padded nodes)
    a8 = jnp.zeros((NODES_PER_GRAPH, NODES_PER_GRAPH), jnp.float32)
    a8 = a8.at[:N_NODES, :N_NODES].set(a3)
    a_big = jnp.kron(jnp.eye(GRAPHS_PER_STEP, dtype=jnp.float32), a8)    # (256, 256)
    slab = slab.at[_A_OFF:_A_OFF + STEP_ROWS, :].set(a_big)

    slab = slab.at[_W1_OFF:_W1_OFF + INPUT_DIM, :HIDDEN_DIM].set(w1)
    slab = slab.at[_B_OFF + _B1_ROW, :HIDDEN_DIM].set(b1)
    slab = slab.at[_B_OFF + _B2_ROW, :HIDDEN_DIM].set(b2)
    slab = slab.at[_B_OFF + _BFC_ROW, :OUTPUT_DIM].set(bfc)
    slab = slab.at[_W2_OFF:_W2_OFF + HIDDEN_DIM, :HIDDEN_DIM].set(w2)
    slab = slab.at[_WFC_OFF:_WFC_OFF + HIDDEN_DIM, :OUTPUT_DIM].set(wfc)

    # pool matrix: row g has 1/N_NODES at the 3 real node rows of graph g in this step
    g = jnp.arange(GRAPHS_PER_STEP)
    rows = jnp.repeat(g, N_NODES)
    cols = (g[:, None] * NODES_PER_GRAPH + jnp.arange(N_NODES)[None, :]).reshape(-1)
    slab = slab.at[_POOL_OFF + rows, cols].set(1.0 / N_NODES)
    return slab.astype(jnp.bfloat16)


def init_params(key):
    k1, k2, k3, k4, k5, k6 = jax.random.split(key, 6)
    w1 = jax.random.normal(k1, (INPUT_DIM, HIDDEN_DIM), jnp.float32) * 0.1
    b1 = jax.random.normal(k2, (HIDDEN_DIM,), jnp.float32) * 0.1
    w2 = jax.random.normal(k3, (HIDDEN_DIM, HIDDEN_DIM), jnp.float32) * 0.1
    b2 = jax.random.normal(k4, (HIDDEN_DIM,), jnp.float32) * 0.1
    wfc = jax.random.normal(k5, (HIDDEN_DIM, OUTPUT_DIM), jnp.float32) * 0.1
    bfc = jax.random.normal(k6, (OUTPUT_DIM,), jnp.float32) * 0.1
    return (w1, b1, w2, b2, wfc, bfc)


def reference_forward(a3, x, params, round_dtype=None):
    """Pure-JAX batched forward.  round_dtype=jnp.bfloat16 mirrors the kernel's
    bf16 matmul-operand rounding (f32 accumulation, same A@(X@W1) order);
    None = full-f32 math."""
    w1, b1, w2, b2, wfc, bfc = params
    if round_dtype is None:
        rnd = lambda v: v
        third = 1.0 / N_NODES
    else:
        rnd = lambda v: v.astype(round_dtype).astype(jnp.float32)
        third = float(jnp.asarray(1.0 / N_NODES, round_dtype).astype(jnp.float32))
    a = rnd(a3)
    xw = jnp.einsum('bif,fh->bih', rnd(x), rnd(w1))
    h1 = jnp.maximum(jnp.einsum('ij,bjh->bih', a, rnd(xw)) + rnd(b1), 0.0)
    hw = jnp.einsum('bih,hk->bik', rnd(h1), rnd(w2))
    h2 = jnp.maximum(jnp.einsum('ij,bjk->bik', a, rnd(hw)) + rnd(b2), 0.0)
    pooled = jnp.sum(third * rnd(h2), axis=1)                            # (B, HIDDEN)
    return jnp.einsum('bh,ho->bo', rnd(pooled), rnd(wfc)) + rnd(bfc)


if __name__ == "__main__":
    key = jax.random.PRNGKey(0)
    kx, kp = jax.random.split(key)

    # Graph from the reference snippet (3 nodes, 6 directed edges), as (2, E):
    # row 0 = sources, row 1 = targets.
    edge_index = jnp.array([[0, 1, 2, 0, 1, 2],
                            [1, 2, 0, 2, 0, 1]], dtype=jnp.int32)

    # Batch of BATCH independent graphs sharing the structure above, each with its
    # own node features (graph 0 plays the role of the original single graph).
    node_features = jax.random.normal(kx, (BATCH, N_NODES, INPUT_DIM), jnp.float32)

    params = init_params(kp)
    a3 = build_gcn_adj(edge_index, N_NODES)
    x_rows = pack_inputs(node_features)
    slab = pack_slab(a3, params)

    out = gnn_regressor_forward(x_rows, slab)             # (BATCH, OUTPUT_DIM)
    out = jax.block_until_ready(out)

    # Tight check: pure-JAX forward mirroring the kernel's bf16 operand rounding.
    ref_bf16 = reference_forward(a3, node_features, params, round_dtype=jnp.bfloat16)
    assert jnp.allclose(out, ref_bf16, atol=1e-3, rtol=1e-3), \
        float(jnp.max(jnp.abs(out - ref_bf16)))

    # Coarse semantic check vs. full-f32 model math (bf16 MXU inputs add ~1e-2 err).
    ref_f32 = reference_forward(a3, node_features, params, round_dtype=None)
    assert jnp.allclose(out, ref_f32, atol=1e-1, rtol=1e-1), \
        float(jnp.max(jnp.abs(out - ref_f32)))

    print("KERNEL_OK")
</pallas_src>

<mosaic_0001>
module attributes {stable_mosaic.version = 11 : i64} {
  func.func @gnn_step_kernel(%arg0: i32, %arg1: memref<256x8xbf16, #tpu.memory_space<vmem>>, %arg2: memref<576x256xbf16, #tpu.memory_space<vmem>>, %arg3: memref<32x128xf32, #tpu.memory_space<vmem>>) attributes {dimension_semantics = [#tpu.dimension_semantics<parallel>], iteration_bounds = array<i64: 2>, scalar_prefetch = 0 : i64, scratch_operands = 0 : i64, tpu.core_type = #tpu.core_type<tc>, window_params = [{transform_indices = @transform_0, window_bounds = array<i64: 256, 8>}, {pipeline_mode = #tpu.pipeline_mode<synchronous>, transform_indices = @transform_1, window_bounds = array<i64: 576, 256>}, {transform_indices = @transform_2, window_bounds = array<i64: 32, 128>}]} {
    %c0 = arith.constant 0 : index
    %c0_0 = arith.constant 0 : index
    %0 = vector.load %arg1[%c0, %c0_0] : memref<256x8xbf16, #tpu.memory_space<vmem>>, vector<256x8xbf16>
    %c0_1 = arith.constant 0 : index
    %c0_2 = arith.constant 0 : index
    %1 = vector.load %arg2[%c0_1, %c0_2] : memref<576x256xbf16, #tpu.memory_space<vmem>>, vector<256x256xbf16>
    %c256 = arith.constant 256 : index
    %c0_3 = arith.constant 0 : index
    %2 = vector.load %arg2[%c256, %c0_3] : memref<576x256xbf16, #tpu.memory_space<vmem>>, vector<8x128xbf16>
    %c272 = arith.constant 272 : index
    %c0_4 = arith.constant 0 : index
    %3 = vector.load %arg2[%c272, %c0_4] : memref<576x256xbf16, #tpu.memory_space<vmem>>, vector<8x128xbf16>
    %4 = arith.extf %3 : vector<8x128xbf16> to vector<8x128xf32>
    %5 = vector.extract_strided_slice %4 {offsets = [0, 0], sizes = [1, 128], strides = [1, 1]} : vector<8x128xf32> to vector<1x128xf32>
    %6 = vector.extract_strided_slice %4 {offsets = [1, 0], sizes = [1, 128], strides = [1, 1]} : vector<8x128xf32> to vector<1x128xf32>
    %7 = vector.extract_strided_slice %4 {offsets = [2, 0], sizes = [1, 128], strides = [1, 1]} : vector<8x128xf32> to vector<1x128xf32>
    %c288 = arith.constant 288 : index
    %c0_5 = arith.constant 0 : index
    %8 = vector.load %arg2[%c288, %c0_5] : memref<576x256xbf16, #tpu.memory_space<vmem>>, vector<128x128xbf16>
    %c416 = arith.constant 416 : index
    %c0_6 = arith.constant 0 : index
    %9 = vector.load %arg2[%c416, %c0_6] : memref<576x256xbf16, #tpu.memory_space<vmem>>, vector<128x128xbf16>
    %c544 = arith.constant 544 : index
    %c0_7 = arith.constant 0 : index
    %10 = vector.load %arg2[%c544, %c0_7] : memref<576x256xbf16, #tpu.memory_space<vmem>>, vector<32x256xbf16>
    %cst = arith.constant dense<0.000000e+00> : vector<256x128xf32>
    %11 = tpu.matmul %0, %2, %cst {dimension_numbers = #tpu.dot_dimension_numbers<[1], [0], [0], [1], [0, 0, 1, 1], [], []>} : vector<256x8xbf16>, vector<8x128xbf16>, vector<256x128xf32> -> vector<256x128xf32>
    %12 = arith.truncf %11 : vector<256x128xf32> to vector<256x128xbf16>
    %cst_8 = arith.constant dense<0.000000e+00> : vector<256x128xf32>
    %13 = tpu.matmul %1, %12, %cst_8 {dimension_numbers = #tpu.dot_dimension_numbers<[1], [0], [0], [1], [0, 0, 1, 1], [], []>} : vector<256x256xbf16>, vector<256x128xbf16>, vector<256x128xf32> -> vector<256x128xf32>
    %14 = vector.broadcast %5 : vector<1x128xf32> to vector<256x128xf32>
    %15 = arith.addf %13, %14 : vector<256x128xf32>
    %cst_9 = arith.constant 0.000000e+00 : f32
    %16 = vector.broadcast %cst_9 : f32 to vector<256x128xf32>
    %17 = arith.maximumf %15, %16 : vector<256x128xf32>
    %18 = arith.truncf %17 : vector<256x128xf32> to vector<256x128xbf16>
    %cst_10 = arith.constant dense<0.000000e+00> : vector<256x128xf32>
    %19 = tpu.matmul %18, %8, %cst_10 {dimension_numbers = #tpu.dot_dimension_numbers<[1], [0], [0], [1], [0, 0, 1, 1], [], []>} : vector<256x128xbf16>, vector<128x128xbf16>, vector<256x128xf32> -> vector<256x128xf32>
    %20 = arith.truncf %19 : vector<256x128xf32> to vector<256x128xbf16>
    %cst_11 = arith.constant dense<0.000000e+00> : vector<256x128xf32>
    %21 = tpu.matmul %1, %20, %cst_11 {dimension_numbers = #tpu.dot_dimension_numbers<[1], [0], [0], [1], [0, 0, 1, 1], [], []>} : vector<256x256xbf16>, vector<256x128xbf16>, vector<256x128xf32> -> vector<256x128xf32>
    %22 = vector.broadcast %6 : vector<1x128xf32> to vector<256x128xf32>
    %23 = arith.addf %21, %22 : vector<256x128xf32>
    %cst_12 = arith.constant 0.000000e+00 : f32
    %24 = vector.broadcast %cst_12 : f32 to vector<256x128xf32>
    %25 = arith.maximumf %23, %24 : vector<256x128xf32>
    %26 = arith.truncf %25 : vector<256x128xf32> to vector<256x128xbf16>
    %cst_13 = arith.constant dense<0.000000e+00> : vector<32x128xf32>
    %27 = tpu.matmul %10, %26, %cst_13 {dimension_numbers = #tpu.dot_dimension_numbers<[1], [0], [0], [1], [0, 0, 1, 1], [], []>} : vector<32x256xbf16>, vector<256x128xbf16>, vector<32x128xf32> -> vector<32x128xf32>
    %28 = arith.truncf %27 : vector<32x128xf32> to vector<32x128xbf16>
    %cst_14 = arith.constant dense<0.000000e+00> : vector<32x128xf32>
    %29 = tpu.matmul %28, %9, %cst_14 {dimension_numbers = #tpu.dot_dimension_numbers<[1], [0], [0], [1], [0, 0, 1, 1], [], []>} : vector<32x128xbf16>, vector<128x128xbf16>, vector<32x128xf32> -> vector<32x128xf32>
    %30 = vector.broadcast %7 : vector<1x128xf32> to vector<32x128xf32>
    %31 = arith.addf %29, %30 : vector<32x128xf32>
    %c0_15 = arith.constant 0 : index
    %c0_16 = arith.constant 0 : index
    %32 = vector.load %arg3[%c0_15, %c0_16] : memref<32x128xf32, #tpu.memory_space<vmem>>, vector<32x128xf32>
    tpu.vector_store %arg3[%c0_15, %c0_16], %31 {strides = array<i32>} : memref<32x128xf32, #tpu.memory_space<vmem>>, vector<32x128xf32>,
    return
  }
  func.func @transform_0(%arg0: i32) -> (i32, i32) {
    %c0_i32 = arith.constant 0 : i32
    %c0_i32_0 = arith.constant 0 : i32
    return %arg0, %c0_i32 : i32, i32
  }
  func.func @transform_1(%arg0: i32) -> (i32, i32) {
    %c0_i32 = arith.constant 0 : i32
    %c0_i32_0 = arith.constant 0 : i32
    %c0_i32_1 = arith.constant 0 : i32
    return %c0_i32, %c0_i32_0 : i32, i32
  }
  func.func @transform_2(%arg0: i32) -> (i32, i32) {
    %c0_i32 = arith.constant 0 : i32
    %c0_i32_0 = arith.constant 0 : i32
    return %arg0, %c0_i32 : i32, i32
  }
}

</mosaic_0001>

<llo_original>
// kernel: tpu_custom_call.1
$region0: #{tpu_custom_call.1}
  #allocation0 [shape = 'u32[]', space=smem, size = 0x4, offset = 0x4, fixed_abs, tag = 'smem constant byte address 0x4 - core index']
  #allocation1 [shape = 'u32[144,128]{1,0:T(1,128)}', space=vmem, size = 0x12000, scoped, tag = 'internal scratch']
  %s0 = inlined_call_operand.vmem [shape: bf16[512,8], index: 0, kind: input, shape index: {}]
  %s1 = inlined_call_operand.hbm [shape: bf16[576,256], index: 1, kind: input, shape index: {}]
  %s2 = inlined_call_operand.hbm [shape: f32[64,128], index: 2, kind: output, shape index: {}]
  %s3 = sld [smem:[#allocation0]]
  $region45: #{tpu_custom_call.1} parent=0
    _
  %s5 = ssub.s32 1, %s3
  %s6 = scalar_select 0, %s5, %s3
  $region1: #{tpu_custom_call.1} parent=0
    #allocation2 [shape = 'u8[294912]{0}', space=vmem, size = 0x48000, scoped, tag = 'input window, operand 1, single buffered']
    #allocation3 [shape = 's32[2]{0}', space=sflag, size = 0x8, scoped, tag = 'scoped memory for tpu_custom_call.1']
    #allocation4 [shape = 's32[2]{0}', space=sflag, size = 0x8, scoped, tag = 'scoped memory for tpu_custom_call.1']
    #allocation5 [shape = 'u8[32768]{0}', space=vmem, size = 0x8000, scoped, tag = 'output window, operand 0']
    %7 = vsyncpa [#allocation3], 0
    %8 = vsyncpa [#allocation4], 0
    %s9 = scalar_lea.sflag [#allocation4], 1
    %10 = vsyncpa %s9, 0
    loop: start=0, step=1, limit=4
    $region2: #{tpu_custom_call.1} parent=1 // loop_pre_header
      _
    $region3: #{tpu_custom_call.1} parent=1 // loop_header
      %s12 = sphi 0, %s16
      %p13 = scmp.ge.s32.totalorder %s12, 4
      %s22 = sphi 0, %s24
      %s25 = sphi 0, %s22
      %s26 = sphi 0, %s25
      %s42 = sphi 0, %s26
      %s46 = sphi 0, %s46
      %s48 = sphi 0, %s46
      %s49 = sphi 0, %s48
      %s63 = sphi 0, %s49
      %s69 = sphi 0, %s71
      %s72 = sphi 0, %s69
      %s73 = sphi 0, %s72
      %s89 = sphi 0, %s73
    $region4: #{tpu_custom_call.1} parent=1 // loop_header_branch
      %15 = sbr.rel (%p13) target = $region8
    $region5: #{tpu_custom_call.1} parent=1 // loop_body
      %s17 = ssub.s32 %s12, 1
      %s18 = ssub.s32 %s12, 2
      %s19 = sadd.s32 %s12, 1
      %s20 = ssub.s32 %s12, %s19
      %p21 = scmp.eq.s32.totalorder %s20, 0
      %s23 = sadd.s32 %s22, 1
      %s24 = scalar_select %p21, %s22, %s23
      %p27 = pneg %p21
      %p28 = scmp.eq.s32.totalorder %s12, 1
      %p29 = por %p27, %p28
      %p30 = scmp.ne.s32.totalorder %s22, %s25
      %p31 = scmp.eq.s32.totalorder %s12, 0
      %p32 = por %p30, %p31
      %p33 = scmp.ne.s32.totalorder %s22, %s25
      %p34 = scmp.eq.s32.totalorder %s17, 1
      %p35 = por %p33, %p34
      %p36 = scmp.ne.s32.totalorder %s25, %s26
      %p37 = scmp.eq.s32.totalorder %s17, 0
      %p38 = por %p36, %p37
      %p39 = scmp.ne.s32.totalorder %s25, %s26
      %p40 = scmp.eq.s32.totalorder %s18, 1
      %p41 = por %p39, %p40
      %p43 = scmp.ne.s32.totalorder %s26, %s42
      %p44 = scmp.eq.s32.totalorder %s18, 0
      %p45 = por %p43, %p44
      %s47 = sadd.s32 %s46, 1
      %p50 = scmp.eq.s32.totalorder %s12, 1
      %p51 = scmp.ne.s32.totalorder %s46, %s48
      %p52 = scmp.eq.s32.totalorder %s12, 0
      %p53 = por %p51, %p52
      %p54 = scmp.ne.s32.totalorder %s46, %s48
      %p55 = scmp.eq.s32.totalorder %s17, 1
      %p56 = por %p54, %p55
      %p57 = scmp.ne.s32.totalorder %s48, %s49
      %p58 = scmp.eq.s32.totalorder %s17, 0
      %p59 = por %p57, %p58
      %p60 = scmp.ne.s32.totalorder %s48, %s49
      %p61 = scmp.eq.s32.totalorder %s18, 1
      %p62 = por %p60, %p61
      %p64 = scmp.ne.s32.totalorder %s49, %s63
      %p65 = scmp.eq.s32.totalorder %s18, 0
      %p66 = por %p64, %p65
      %s67 = ssub.s32 %s12, %s19
      %p68 = scmp.eq.s32.totalorder %s67, 0
      %s70 = sadd.s32 %s69, 1
      %s71 = scalar_select %p68, %s69, %s70
      %p74 = pneg %p68
      %p75 = scmp.eq.s32.totalorder %s12, 1
      %p76 = por %p74, %p75
      %p77 = scmp.ne.s32.totalorder %s69, %s72
      %p78 = scmp.eq.s32.totalorder %s12, 0
      %p79 = por %p77, %p78
      %p80 = scmp.ne.s32.totalorder %s69, %s72
      %p81 = scmp.eq.s32.totalorder %s17, 1
      %p82 = por %p80, %p81
      %p83 = scmp.ne.s32.totalorder %s72, %s73
      %p84 = scmp.eq.s32.totalorder %s17, 0
      %p85 = por %p83, %p84
      %p86 = scmp.ne.s32.totalorder %s72, %s73
      %p87 = scmp.eq.s32.totalorder %s18, 1
      %p88 = por %p86, %p87
      %p90 = scmp.ne.s32.totalorder %s73, %s89
      %p91 = scmp.eq.s32.totalorder %s18, 0
      %p92 = por %p90, %p91
      %p93 = scmp.le.s32.totalorder 1, %s12
      %p94 = scmp.lt.s32.totalorder %s12, 3
      %p95 = pnand %p93, %p94
      %p96 = pneg %p95
      // Predicated region
      $region9: #{tpu_custom_call.1} parent=5 // pred_check
        _
      $region10: #{tpu_custom_call.1} parent=5 // pred_check_branch
        %98 = sbr.rel (%p95) target = $region12
      $region11: #{tpu_custom_call.1} parent=5 // pred_region
        %s99 = ssub.s32 %s12, 1
        // Predicated region
        $region13: #{tpu_custom_call.1} parent=11 // pred_check
          %p100 = pneg %p59
        $region14: #{tpu_custom_call.1} parent=11 // pred_check_branch
          %102 = sbr.rel (%p100) target = $region16
        $region15: #{tpu_custom_call.1} parent=11 // pred_region
          %s104 = ssub.s32 9216, 9216
          %105 = vsyncadd [#allocation3], %s104
          %s106 = sshll.u32 [#allocation2], 4
          %s107 = int_to_ptr.vmem [resolvable:$true] %s106
          %112 = dma.hbm_to_vmem [thread:$0]  %s1, 9216, %s107, [#allocation3], 128, 128, 8
        $region16: #{tpu_custom_call.1} parent=11 // pred_fallthru
          _
      $region12: #{tpu_custom_call.1} parent=5 // pred_fallthru
        _
      %p113 = scmp.lt.s32.totalorder %s12, 2
      // Predicated region
      $region17: #{tpu_custom_call.1} parent=5 // pred_check
        %p114 = pneg %p113
      $region18: #{tpu_custom_call.1} parent=5 // pred_check_branch
        %116 = sbr.rel (%p114) target = $region20
      $region19: #{tpu_custom_call.1} parent=5 // pred_region
        // Predicated region
        $region21: #{tpu_custom_call.1} parent=19 // pred_check
          %p117 = pneg %p32
        $region22: #{tpu_custom_call.1} parent=19 // pred_check_branch
          %119 = sbr.rel (%p117) target = $region24
        $region23: #{tpu_custom_call.1} parent=19 // pred_region
          %s120 = smul.u32 32, %s12
          %p121 = scmp.lt.s32.totalorder %s120, 63
          %s122 = scalar_select %p121, %s120, 63
          %s123 = smul.addr %s122, 4
          %s124 = scalar_lea.vmem %s0, %s123
          %s125 = smul.u32 32, %s12
        $region24: #{tpu_custom_call.1} parent=19 // pred_fallthru
          _
      $region20: #{tpu_custom_call.1} parent=5 // pred_fallthru
        _
      %p126 = scmp.le.s32.totalorder 1, %s12
      %p127 = scmp.lt.s32.totalorder %s12, 3
      %p128 = pnand %p126, %p127
      %p129 = pneg %p128
      // Predicated region
      $region25: #{tpu_custom_call.1} parent=5 // pred_check
        _
      $region26: #{tpu_custom_call.1} parent=5 // pred_check_branch
        %131 = sbr.rel (%p128) target = $region28
      $region27: #{tpu_custom_call.1} parent=5 // pred_region
        %s132 = ssub.s32 %s12, 1
        // Predicated region
        $region29: #{tpu_custom_call.1} parent=27 // pred_check
          %p133 = pneg %p59
        $region30: #{tpu_custom_call.1} parent=27 // pred_check_branch
          %135 = sbr.rel (%p133) target = $region32
        $region31: #{tpu_custom_call.1} parent=27 // pred_region
          %136 = dma.done [#allocation3], 9216
        $region32: #{tpu_custom_call.1} parent=27 // pred_fallthru
          _
        %s137 = smul.u32 32, %s17
        %p138 = scmp.lt.s32.totalorder %s137, 63
        %s139 = scalar_select %p138, %s137, 63
        %s140 = smul.addr %s139, 4
        %s141 = scalar_lea.vmem %s0, %s140
        %p142 = pneg %p38
        %p143 = pneg %p35
        %p144 = pneg %p59
        %p145 = pneg %p56
        %p146 = pneg %p85
        %p147 = pneg %p82
        %s148 = sand.u32 %s72, 1
        %s149 = scalar_lea.sflag [#allocation4], %s148
        %s150 = sand.u32 %s72, 1
        %s151 = smul.addr %s150, 32
        %s152 = scalar_lea.vmem [#allocation5], %s151
        %s153 = smul.u32 32, %s17
        %p154 = scmp.lt.s32.totalorder %s153, 63
        %s155 = scalar_select %p154, %s153, 63
        %s156 = smul.addr %s155, 4
        %s157 = scalar_lea.vmem %s0, %s156
        %s158 = smul.u32 32, %s17
        %s159 = smul.u32 4, %s17
        %v161 = vld [vmem:[%s157] sm:$0xf]
        %v162 = vld [vmem:[%s157 + $0x4] sm:$0xf]
        %v163 = vld [vmem:[%s157 + $0x8] sm:$0xf]
        %v164 = vld [vmem:[%s157 + $0xc] sm:$0xf]
        %v165 = vld [vmem:[%s157 + $0x10] sm:$0xf]
        %v166 = vld [vmem:[%s157 + $0x14] sm:$0xf]
        %v167 = vld [vmem:[%s157 + $0x18] sm:$0xf]
        %v168 = vld [vmem:[%s157 + $0x1c] sm:$0xf]
        %v169 = vld [vmem:[%s157 + $0x20] sm:$0xf]
        %v170 = vld [vmem:[%s157 + $0x24] sm:$0xf]
        %v171 = vld [vmem:[%s157 + $0x28] sm:$0xf]
        %v172 = vld [vmem:[%s157 + $0x2c] sm:$0xf]
        %v173 = vld [vmem:[%s157 + $0x30] sm:$0xf]
        %v174 = vld [vmem:[%s157 + $0x34] sm:$0xf]
        %v175 = vld [vmem:[%s157 + $0x38] sm:$0xf]
        %v176 = vld [vmem:[%s157 + $0x3c] sm:$0xf]
        %v177 = vld [vmem:[%s157 + $0x40] sm:$0xf]
        %v178 = vld [vmem:[%s157 + $0x44] sm:$0xf]
        %v179 = vld [vmem:[%s157 + $0x48] sm:$0xf]
        %v180 = vld [vmem:[%s157 + $0x4c] sm:$0xf]
        %v181 = vld [vmem:[%s157 + $0x50] sm:$0xf]
        %v182 = vld [vmem:[%s157 + $0x54] sm:$0xf]
        %v183 = vld [vmem:[%s157 + $0x58] sm:$0xf]
        %v184 = vld [vmem:[%s157 + $0x5c] sm:$0xf]
        %v185 = vld [vmem:[%s157 + $0x60] sm:$0xf]
        %v186 = vld [vmem:[%s157 + $0x64] sm:$0xf]
        %v187 = vld [vmem:[%s157 + $0x68] sm:$0xf]
        %v188 = vld [vmem:[%s157 + $0x6c] sm:$0xf]
        %v189 = vld [vmem:[%s157 + $0x70] sm:$0xf]
        %v190 = vld [vmem:[%s157 + $0x74] sm:$0xf]
        %v191 = vld [vmem:[%s157 + $0x78] sm:$0xf]
        %v192 = vld [vmem:[%s157 + $0x7c] sm:$0xf]
        %v193 = vld [vmem:[#allocation2] sm:$0xff]
        %v194 = vld [vmem:[#allocation2 + $0x8] sm:$0xff]
        %v195 = vld [vmem:[#allocation2 + $0x10] sm:$0xff]
        %v196 = vld [vmem:[#allocation2 + $0x18] sm:$0xff]
        %v197 = vld [vmem:[#allocation2 + $0x20] sm:$0xff]
        %v198 = vld [vmem:[#allocation2 + $0x28] sm:$0xff]
        %v199 = vld [vmem:[#allocation2 + $0x30] sm:$0xff]
        %v200 = vld [vmem:[#allocation2 + $0x38] sm:$0xff]
        %v201 = vld [vmem:[#allocation2 + $0x40] sm:$0xff]
        %v202 = vld [vmem:[#allocation2 + $0x48] sm:$0xff]
        %v203 = vld [vmem:[#allocation2 + $0x50] sm:$0xff]
        %v204 = vld [vmem:[#allocation2 + $0x58] sm:$0xff]
        %v205 = vld [vmem:[#allocation2 + $0x60] sm:$0xff]
        %v206 = vld [vmem:[#allocation2 + $0x68] sm:$0xff]
        %v207 = vld [vmem:[#allocation2 + $0x70] sm:$0xff]
        %v208 = vld [vmem:[#allocation2 + $0x78] sm:$0xff]
        %v209 = vld [vmem:[#allocation2 + $0x80] sm:$0xff]
        %v210 = vld [vmem:[#allocation2 + $0x88] sm:$0xff]
        %v211 = vld [vmem:[#allocation2 + $0x90] sm:$0xff]
        %v212 = vld [vmem:[#allocation2 + $0x98] sm:$0xff]
        %v213 = vld [vmem:[#allocation2 + $0xa0] sm:$0xff]
        %v214 = vld [vmem:[#allocation2 + $0xa8] sm:$0xff]
        %v215 = vld [vmem:[#allocation2 + $0xb0] sm:$0xff]
        %v216 = vld [vmem:[#allocation2 + $0xb8] sm:$0xff]
        %v217 = vld [vmem:[#allocation2 + $0xc0] sm:$0xff]
        %v218 = vld [vmem:[#allocation2 + $0xc8] sm:$0xff]
        %v219 = vld [vmem:[#allocation2 + $0xd0] sm:$0xff]
        %v220 = vld [vmem:[#allocation2 + $0xd8] sm:$0xff]
        %v221 = vld [vmem:[#allocation2 + $0xe0] sm:$0xff]
        %v222 = vld [vmem:[#allocation2 + $0xe8] sm:$0xff]
        %v223 = vld [vmem:[#allocation2 + $0xf0] sm:$0xff]
        %v224 = vld [vmem:[#allocation2 + $0xf8] sm:$0xff]
        %v225 = vld [vmem:[#allocation2 + $0x100] sm:$0xf]
        %v226 = vld [vmem:[#allocation2 + $0x110] sm:$0xf]
        %v227 = vunpack.c.l.bf16 %v226
        %v228 = vld [vmem:[#allocation2 + $0x120] sm:$0xf]
        %v229 = vld [vmem:[#allocation2 + $0x128] sm:$0xf]
        %v230 = vld [vmem:[#allocation2 + $0x130] sm:$0xf]
        %v231 = vld [vmem:[#allocation2 + $0x138] sm:$0xf]
        %v232 = vld [vmem:[#allocation2 + $0x140] sm:$0xf]
        %v233 = vld [vmem:[#allocation2 + $0x148] sm:$0xf]
        %v234 = vld [vmem:[#allocation2 + $0x150] sm:$0xf]
        %v235 = vld [vmem:[#allocation2 + $0x158] sm:$0xf]
        %v236 = vld [vmem:[#allocation2 + $0x160] sm:$0xf]
        %v237 = vld [vmem:[#allocation2 + $0x168] sm:$0xf]
        %v238 = vld [vmem:[#allocation2 + $0x170] sm:$0xf]
        %v239 = vld [vmem:[#allocation2 + $0x178] sm:$0xf]
        %v240 = vld [vmem:[#allocation2 + $0x180] sm:$0xf]
        %v241 = vld [vmem:[#allocation2 + $0x188] sm:$0xf]
        %v242 = vld [vmem:[#allocation2 + $0x190] sm:$0xf]
        %v243 = vld [vmem:[#allocation2 + $0x198] sm:$0xf]
        %v244 = vld [vmem:[#allocation2 + $0x1a0] sm:$0xf]
        %v245 = vld [vmem:[#allocation2 + $0x1a8] sm:$0xf]
        %v246 = vld [vmem:[#allocation2 + $0x1b0] sm:$0xf]
        %v247 = vld [vmem:[#allocation2 + $0x1b8] sm:$0xf]
        %v248 = vld [vmem:[#allocation2 + $0x1c0] sm:$0xf]
        %v249 = vld [vmem:[#allocation2 + $0x1c8] sm:$0xf]
        %v250 = vld [vmem:[#allocation2 + $0x1d0] sm:$0xf]
        %v251 = vld [vmem:[#allocation2 + $0x1d8] sm:$0xf]
        %v252 = vld [vmem:[#allocation2 + $0x1e0] sm:$0xf]
        %v253 = vld [vmem:[#allocation2 + $0x1e8] sm:$0xf]
        %v254 = vld [vmem:[#allocation2 + $0x1f0] sm:$0xf]
        %v255 = vld [vmem:[#allocation2 + $0x1f8] sm:$0xf]
        %v256 = vld [vmem:[#allocation2 + $0x200] sm:$0xf]
        %v257 = vld [vmem:[#allocation2 + $0x208] sm:$0xf]
        %v258 = vld [vmem:[#allocation2 + $0x210] sm:$0xf]
        %v259 = vld [vmem:[#allocation2 + $0x218] sm:$0xf]
        %v260 = vld [vmem:[#allocation2 + $0x220] sm:$0xff]
        %v261 = vld [vmem:[#allocation2 + $0x228] sm:$0xff]
        %v262 = vld [vmem:[#allocation2 + $0x230] sm:$0xff]
        %v263 = vld [vmem:[#allocation2 + $0x238] sm:$0xff]
        %v296 = vunpack.c.l.b16 %v161
        %v297 = vunpack.c.l.b16 %v162
        %v298 = vunpack.c.l.b16 %v163
        %v299 = vunpack.c.l.b16 %v164
        %v300 = vunpack.c.l.b16 %v165
        %v301 = vunpack.c.l.b16 %v166
        %v302 = vunpack.c.l.b16 %v167
        %v303 = vunpack.c.l.b16 %v168
        %v304 = vunpack.c.l.b16 %v169
        %v305 = vunpack.c.l.b16 %v170
        %v306 = vunpack.c.l.b16 %v171
        %v307 = vunpack.c.l.b16 %v172
        %v308 = vunpack.c.l.b16 %v173
        %v309 = vunpack.c.l.b16 %v174
        %v310 = vunpack.c.l.b16 %v175
        %v311 = vunpack.c.l.b16 %v176
        %v312 = vunpack.c.l.b16 %v177
        %v313 = vunpack.c.l.b16 %v178
        %v314 = vunpack.c.l.b16 %v179
        %v315 = vunpack.c.l.b16 %v180
        %v316 = vunpack.c.l.b16 %v181
        %v317 = vunpack.c.l.b16 %v182
        %v318 = vunpack.c.l.b16 %v183
        %v319 = vunpack.c.l.b16 %v184
        %v320 = vunpack.c.l.b16 %v185
        %v321 = vunpack.c.l.b16 %v186
        %v322 = vunpack.c.l.b16 %v187
        %v323 = vunpack.c.l.b16 %v188
        %v324 = vunpack.c.l.b16 %v189
        %v325 = vunpack.c.l.b16 %v190
        %v326 = vunpack.c.l.b16 %v191
        %v327 = vunpack.c.l.b16 %v192
        %v328 = vpack.c.b16 %v297, %v296
        %v329 = vpack.c.b16 %v299, %v298
        %v330 = vpack.c.b16 %v301, %v300
        %v331 = vpack.c.b16 %v303, %v302
        %v332 = vpack.c.b16 %v305, %v304
        %v333 = vpack.c.b16 %v307, %v306
        %v334 = vpack.c.b16 %v309, %v308
        %v335 = vpack.c.b16 %v311, %v310
        %v336 = vpack.c.b16 %v313, %v312
        %v337 = vpack.c.b16 %v315, %v314
        %v338 = vpack.c.b16 %v317, %v316
        %v339 = vpack.c.b16 %v319, %v318
        %v340 = vpack.c.b16 %v321, %v320
        %v341 = vpack.c.b16 %v323, %v322
        %v342 = vpack.c.b16 %v325, %v324
        %v343 = vpack.c.b16 %v327, %v326
        %vm344 = vcmask 64512
        %v346 = vsel %vm344, %v328, 0
        %v349 = vsel %vm344, %v329, 0
        %v352 = vsel %vm344, %v330, 0
        %v355 = vsel %vm344, %v331, 0
        %v358 = vsel %vm344, %v332, 0
        %v361 = vsel %vm344, %v333, 0
        %v364 = vsel %vm344, %v334, 0
        %v367 = vsel %vm344, %v335, 0
        %v370 = vsel %vm344, %v336, 0
        %v373 = vsel %vm344, %v337, 0
        %v376 = vsel %vm344, %v338, 0
        %v379 = vsel %vm344, %v339, 0
        %v382 = vsel %vm344, %v340, 0
        %v385 = vsel %vm344, %v341, 0
        %v388 = vsel %vm344, %v342, 0
        %v391 = vsel %vm344, %v343, 0
        %vm393 = vcmask 1043456
        %v395 = vsel %vm393, %v225, 0
        %397 = vmatprep.subr.bf16.mxu0 0
        %398 = vmatpush1.bf16.msra.mxu0 %v395
        %399 = vmatprep.subr.bf16.mxu0 0
        %400 = vmatpush1.bf16.msra.mxu0 0
        %401 = vmatprep.subr.bf16.mxu0 0
        %402 = vmatpush1.bf16.msra.mxu0 0
        %403 = vmatprep.subr.bf16.mxu0 0
        %404 = vmatpush1.bf16.msra.mxu0 0
        %405 = vmatprep.subr.bf16.mxu0 0
        %406 = vmatpush1.bf16.msra.mxu0 0
        %407 = vmatprep.subr.bf16.mxu0 0
        %408 = vmatpush1.bf16.msra.mxu0 0
        %409 = vmatprep.subr.bf16.mxu0 0
        %410 = vmatpush1.bf16.msra.mxu0 0
        %411 = vmatprep.subr.bf16.mxu0 0
        %412 = vmatpush1.bf16.msra.mxu0 0
        %413 = vmatprep.subr.bf16.mxu0 0
        %414 = vmatpush1.bf16.msra.mxu0 0
        %415 = vmatprep.subr.bf16.mxu0 0
        %416 = vmatpush1.bf16.msra.mxu0 0
        %417 = vmatprep.subr.bf16.mxu0 0
        %418 = vmatpush1.bf16.msra.mxu0 0
        %419 = vmatprep.subr.bf16.mxu0 0
        %420 = vmatpush1.bf16.msra.mxu0 0
        %421 = vmatprep.subr.bf16.mxu0 0
        %422 = vmatpush1.bf16.msra.mxu0 0
        %423 = vmatprep.subr.bf16.mxu0 0
        %424 = vmatpush1.bf16.msra.mxu0 0
        %425 = vmatprep.subr.bf16.mxu0 0
        %426 = vmatpush1.bf16.msra.mxu0 0
        %427 = vmatprep.subr.bf16.mxu0 0
        %428 = vmatpush1.bf16.msra.mxu0 0
        %429 = vmatprep.mubr.bf16.mxu0 0
        %430 = vmatmul.mubr.bf16.gmra.mrb[0].mxu0 %v346
        %v431 = vpop.f32.mrb[0].mxu0
        %v432 = vadd.f32 0.0, %v431
        %v433 = vpop.f32.mrb[0].mxu0
        %v434 = vpop.f32.mrb[0].mxu0
        %v435 = vadd.f32 0.0, %v434
        %v436 = vpop.f32.mrb[0].mxu0
        %437 = vmatprep.mubr.bf16.mxu0 0
        %438 = vmatmul.mubr.bf16.gmra.mrb[0].mxu0 %v349
        %v439 = vpop.f32.mrb[0].mxu0
        %v440 = vadd.f32 0.0, %v439
        %v441 = vpop.f32.mrb[0].mxu0
        %v442 = vpop.f32.mrb[0].mxu0
        %v443 = vadd.f32 0.0, %v442
        %v444 = vpop.f32.mrb[0].mxu0
        %445 = vmatprep.mubr.bf16.mxu0 0
        %446 = vmatmul.mubr.bf16.gmra.mrb[0].mxu0 %v352
        %v447 = vpop.f32.mrb[0].mxu0
        %v448 = vadd.f32 0.0, %v447
        %v449 = vpop.f32.mrb[0].mxu0
        %v450 = vpop.f32.mrb[0].mxu0
        %v451 = vadd.f32 0.0, %v450
        %v452 = vpop.f32.mrb[0].mxu0
        %453 = vmatprep.mubr.bf16.mxu0 0
        %454 = vmatmul.mubr.bf16.gmra.mrb[0].mxu0 %v355
        %v455 = vpop.f32.mrb[0].mxu0
        %v456 = vadd.f32 0.0, %v455
        %v457 = vpop.f32.mrb[0].mxu0
        %v458 = vpop.f32.mrb[0].mxu0
        %v459 = vadd.f32 0.0, %v458
        %v460 = vpop.f32.mrb[0].mxu0
        %461 = vmatprep.mubr.bf16.mxu0 0
        %462 = vmatmul.mubr.bf16.gmra.mrb[0].mxu0 %v358
        %v463 = vpop.f32.mrb[0].mxu0
        %v464 = vadd.f32 0.0, %v463
        %v465 = vpop.f32.mrb[0].mxu0
        %v466 = vpop.f32.mrb[0].mxu0
        %v467 = vadd.f32 0.0, %v466
        %v468 = vpop.f32.mrb[0].mxu0
        %469 = vmatprep.mubr.bf16.mxu0 0
        %470 = vmatmul.mubr.bf16.gmra.mrb[0].mxu0 %v361
        %v471 = vpop.f32.mrb[0].mxu0
        %v472 = vadd.f32 0.0, %v471
        %v473 = vpop.f32.mrb[0].mxu0
        %v474 = vpop.f32.mrb[0].mxu0
        %v475 = vadd.f32 0.0, %v474
        %v476 = vpop.f32.mrb[0].mxu0
        %477 = vmatprep.mubr.bf16.mxu0 0
        %478 = vmatmul.mubr.bf16.gmra.mrb[0].mxu0 %v364
        %v479 = vpop.f32.mrb[0].mxu0
        %v480 = vadd.f32 0.0, %v479
        %v481 = vpop.f32.mrb[0].mxu0
        %v482 = vpop.f32.mrb[0].mxu0
        %v483 = vadd.f32 0.0, %v482
        %v484 = vpop.f32.mrb[0].mxu0
        %485 = vmatprep.mubr.bf16.mxu0 0
        %486 = vmatmul.mubr.bf16.gmra.mrb[0].mxu0 %v367
        %v487 = vpop.f32.mrb[0].mxu0
        %v488 = vadd.f32 0.0, %v487
        %v489 = vpop.f32.mrb[0].mxu0
        %v490 = vpop.f32.mrb[0].mxu0
        %v491 = vadd.f32 0.0, %v490
        %v492 = vpop.f32.mrb[0].mxu0
        %493 = vmatprep.mubr.bf16.mxu0 0
        %494 = vmatmul.mubr.bf16.gmra.mrb[0].mxu0 %v370
        %v495 = vpop.f32.mrb[0].mxu0
        %v496 = vadd.f32 0.0, %v495
        %v497 = vpop.f32.mrb[0].mxu0
        %v498 = vpop.f32.mrb[0].mxu0
        %v499 = vadd.f32 0.0, %v498
        %v500 = vpop.f32.mrb[0].mxu0
        %501 = vmatprep.mubr.bf16.mxu0 0
        %502 = vmatmul.mubr.bf16.gmra.mrb[0].mxu0 %v373
        %v503 = vpop.f32.mrb[0].mxu0
        %v504 = vadd.f32 0.0, %v503
        %v505 = vpop.f32.mrb[0].mxu0
        %v506 = vpop.f32.mrb[0].mxu0
        %v507 = vadd.f32 0.0, %v506
        %v508 = vpop.f32.mrb[0].mxu0
        %509 = vmatprep.mubr.bf16.mxu0 0
        %510 = vmatmul.mubr.bf16.gmra.mrb[0].mxu0 %v376
        %v511 = vpop.f32.mrb[0].mxu0
        %v512 = vadd.f32 0.0, %v511
        %v513 = vpop.f32.mrb[0].mxu0
        %v514 = vpop.f32.mrb[0].mxu0
        %v515 = vadd.f32 0.0, %v514
        %v516 = vpop.f32.mrb[0].mxu0
        %517 = vmatprep.mubr.bf16.mxu0 0
        %518 = vmatmul.mubr.bf16.gmra.mrb[0].mxu0 %v379
        %v519 = vpop.f32.mrb[0].mxu0
        %v520 = vadd.f32 0.0, %v519
        %v521 = vpop.f32.mrb[0].mxu0
        %v522 = vpop.f32.mrb[0].mxu0
        %v523 = vadd.f32 0.0, %v522
        %v524 = vpop.f32.mrb[0].mxu0
        %525 = vmatprep.mubr.bf16.mxu0 0
        %526 = vmatmul.mubr.bf16.gmra.mrb[0].mxu0 %v382
        %v527 = vpop.f32.mrb[0].mxu0
        %v528 = vadd.f32 0.0, %v527
        %v529 = vpop.f32.mrb[0].mxu0
        %v530 = vpop.f32.mrb[0].mxu0
        %v531 = vadd.f32 0.0, %v530
        %v532 = vpop.f32.mrb[0].mxu0
        %533 = vmatprep.mubr.bf16.mxu0 0
        %534 = vmatmul.mubr.bf16.gmra.mrb[0].mxu0 %v385
        %v535 = vpop.f32.mrb[0].mxu0
        %v536 = vadd.f32 0.0, %v535
        %v537 = vpop.f32.mrb[0].mxu0
        %v538 = vpop.f32.mrb[0].mxu0
        %v539 = vadd.f32 0.0, %v538
        %v540 = vpop.f32.mrb[0].mxu0
        %541 = vmatprep.mubr.bf16.mxu0 0
        %542 = vmatmul.mubr.bf16.gmra.mrb[0].mxu0 %v388
        %v543 = vpop.f32.mrb[0].mxu0
        %v544 = vadd.f32 0.0, %v543
        %v545 = vpop.f32.mrb[0].mxu0
        %v546 = vpop.f32.mrb[0].mxu0
        %v547 = vadd.f32 0.0, %v546
        %v548 = vpop.f32.mrb[0].mxu0
        %549 = vmatprep.mubr.bf16.mxu0 0
        %550 = vmatmul.mubr.bf16.gmra.mrb[0].mxu0 %v391
        %v551 = vpop.f32.mrb[0].mxu0
        %v552 = vadd.f32 0.0, %v551
        %v553 = vpop.f32.mrb[0].mxu0
        %v554 = vpop.f32.mrb[0].mxu0
        %v555 = vadd.f32 0.0, %v554
        %v556 = vpop.f32.mrb[0].mxu0
        %557 = vdwg.mxu0
        %v558 = vpack.c.bf16 %v435, %v432
        %v559 = vpack.c.bf16 %v443, %v440
        %v560 = vpack.c.bf16 %v451, %v448
        %v561 = vpack.c.bf16 %v459, %v456
        %v562 = vpack.c.bf16 %v467, %v464
        %v563 = vpack.c.bf16 %v475, %v472
        %v564 = vpack.c.bf16 %v483, %v480
        %v565 = vpack.c.bf16 %v491, %v488
        %v566 = vpack.c.bf16 %v499, %v496
        %v567 = vpack.c.bf16 %v507, %v504
        %v568 = vpack.c.bf16 %v515, %v512
        %v569 = vpack.c.bf16 %v523, %v520
        %v570 = vpack.c.bf16 %v531, %v528
        %v571 = vpack.c.bf16 %v539, %v536
        %v572 = vpack.c.bf16 %v547, %v544
        %v573 = vpack.c.bf16 %v555, %v552
        %v574 = vlaneseq
        %v575 = vshrl.u32 %v574, 7
        %v576 = vsub.s32 0, %v575
        %v577 = vrot.slane %v227, %v576
        %v610 = vunpack.c.l.b16 %v193
        %v611 = vunpack.c.h.b16 %v193
        %v612 = vunpack.c.l.b16 %v194
        %v613 = vunpack.c.h.b16 %v194
        %v614 = vunpack.c.l.b16 %v195
        %v615 = vunpack.c.h.b16 %v195
        %v616 = vunpack.c.l.b16 %v196
        %v617 = vunpack.c.h.b16 %v196
        %v618 = vunpack.c.l.b16 %v197
        %v619 = vunpack.c.h.b16 %v197
        %v620 = vunpack.c.l.b16 %v198
        %v621 = vunpack.c.h.b16 %v198
        %v622 = vunpack.c.l.b16 %v199
        %v623 = vunpack.c.h.b16 %v199
        %v624 = vunpack.c.l.b16 %v200
        %v625 = vunpack.c.h.b16 %v200
        %v626 = vunpack.c.l.b16 %v201
        %v627 = vunpack.c.h.b16 %v201
        %v628 = vunpack.c.l.b16 %v202
        %v629 = vunpack.c.h.b16 %v202
        %v630 = vunpack.c.l.b16 %v203
        %v631 = vunpack.c.h.b16 %v203
        %v632 = vunpack.c.l.b16 %v204
        %v633 = vunpack.c.h.b16 %v204
        %v634 = vunpack.c.l.b16 %v205
        %v635 = vunpack.c.h.b16 %v205
        %v636 = vunpack.c.l.b16 %v206
        %v637 = vunpack.c.h.b16 %v206
        %v638 = vunpack.c.l.b16 %v207
        %v639 = vunpack.c.h.b16 %v207
        %v640 = vunpack.c.l.b16 %v208
        %v641 = vunpack.c.h.b16 %v208
        %v642 = vunpack.c.l.b16 %v209
        %v643 = vunpack.c.h.b16 %v209
        %v644 = vunpack.c.l.b16 %v210
        %v645 = vunpack.c.h.b16 %v210
        %v646 = vunpack.c.l.b16 %v211
        %v647 = vunpack.c.h.b16 %v211
        %v648 = vunpack.c.l.b16 %v212
        %v649 = vunpack.c.h.b16 %v212
        %v650 = vunpack.c.l.b16 %v213
        %v651 = vunpack.c.h.b16 %v213
        %v652 = vunpack.c.l.b16 %v214
        %v653 = vunpack.c.h.b16 %v214
        %v654 = vunpack.c.l.b16 %v215
        %v655 = vunpack.c.h.b16 %v215
        %v656 = vunpack.c.l.b16 %v216
        %v657 = vunpack.c.h.b16 %v216
        %v658 = vunpack.c.l.b16 %v217
        %v659 = vunpack.c.h.b16 %v217
        %v660 = vunpack.c.l.b16 %v218
        %v661 = vunpack.c.h.b16 %v218
        %v662 = vunpack.c.l.b16 %v219
        %v663 = vunpack.c.h.b16 %v219
        %v664 = vunpack.c.l.b16 %v220
        %v665 = vunpack.c.h.b16 %v220
        %v666 = vunpack.c.l.b16 %v221
        %v667 = vunpack.c.h.b16 %v221
        %v668 = vunpack.c.l.b16 %v222
        %v669 = vunpack.c.h.b16 %v222
        %v670 = vunpack.c.l.b16 %v223
        %v671 = vunpack.c.h.b16 %v223
        %v672 = vunpack.c.l.b16 %v224
        %v673 = vunpack.c.h.b16 %v224
        %v674 = vpack.c.b16 %v612, %v610
        %v675 = vpack.c.b16 %v613, %v611
        %v676 = vpack.c.b16 %v616, %v614
        %v677 = vpack.c.b16 %v617, %v615
        %v678 = vpack.c.b16 %v620, %v618
        %v679 = vpack.c.b16 %v621, %v619
        %v680 = vpack.c.b16 %v624, %v622
        %v681 = vpack.c.b16 %v625, %v623
        %v682 = vpack.c.b16 %v628, %v626
        %v683 = vpack.c.b16 %v629, %v627
        %v684 = vpack.c.b16 %v632, %v630
        %v685 = vpack.c.b16 %v633, %v631
        %v686 = vpack.c.b16 %v636, %v634
        %v687 = vpack.c.b16 %v637, %v635
        %v688 = vpack.c.b16 %v640, %v638
        %v689 = vpack.c.b16 %v641, %v639
        %v690 = vpack.c.b16 %v644, %v642
        %v691 = vpack.c.b16 %v645, %v643
        %v692 = vpack.c.b16 %v648, %v646
        %v693 = vpack.c.b16 %v649, %v647
        %v694 = vpack.c.b16 %v652, %v650
        %v695 = vpack.c.b16 %v653, %v651
        %v696 = vpack.c.b16 %v656, %v654
        %v697 = vpack.c.b16 %v657, %v655
        %v698 = vpack.c.b16 %v660, %v658
        %v699 = vpack.c.b16 %v661, %v659
        %v700 = vpack.c.b16 %v664, %v662
        %v701 = vpack.c.b16 %v665, %v663
        %v702 = vpack.c.b16 %v668, %v666
        %v703 = vpack.c.b16 %v669, %v667
        %v704 = vpack.c.b16 %v672, %v670
        %v705 = vpack.c.b16 %v673, %v671
        %738 = vmatprep.subr.bf16.mxu0 0
        %739 = vmatpush1.bf16.msra.mxu0 %v558
        %740 = vmatprep.subr.bf16.mxu0 0
        %741 = vmatpush1.bf16.msra.mxu0 %v559
        %742 = vmatprep.subr.bf16.mxu0 0
        %743 = vmatpush1.bf16.msra.mxu0 %v560
        %744 = vmatprep.subr.bf16.mxu0 0
        %745 = vmatpush1.bf16.msra.mxu0 %v561
        %746 = vmatprep.subr.bf16.mxu0 0
        %747 = vmatpush1.bf16.msra.mxu0 %v562
        %748 = vmatprep.subr.bf16.mxu0 0
        %749 = vmatpush1.bf16.msra.mxu0 %v563
        %750 = vmatprep.subr.bf16.mxu0 0
        %751 = vmatpush1.bf16.msra.mxu0 %v564
        %752 = vmatprep.subr.bf16.mxu0 0
        %753 = vmatpush1.bf16.msra.mxu0 %v565
        %754 = vmatprep.subr.bf16.mxu0 0
        %755 = vmatpush1.bf16.msra.mxu0 %v566
        %756 = vmatprep.subr.bf16.mxu0 0
        %757 = vmatpush1.bf16.msra.mxu0 %v567
        %758 = vmatprep.subr.bf16.mxu0 0
        %759 = vmatpush1.bf16.msra.mxu0 %v568
        %760 = vmatprep.subr.bf16.mxu0 0
        %761 = vmatpush1.bf16.msra.mxu0 %v569
        %762 = vmatprep.subr.bf16.mxu0 0
        %763 = vmatpush1.bf16.msra.mxu0 %v570
        %764 = vmatprep.subr.bf16.mxu0 0
        %765 = vmatpush1.bf16.msra.mxu0 %v571
        %766 = vmatprep.subr.bf16.mxu0 0
        %767 = vmatpush1.bf16.msra.mxu0 %v572
        %768 = vmatprep.subr.bf16.mxu0 0
        %769 = vmatpush1.bf16.msra.mxu0 %v573
        %770 = vmatprep.mubr.bf16.mxu0 %v675
        %771 = vmatmul.mubr.bf16.gmra.mrb[0].mxu0 %v674
        %v772 = vpop.f32.mrb[0].mxu0
        %v773 = vadd.f32 %v577, %v772
        %v774 = vpop.f32.mrb[0].mxu0
        %v775 = vpop.f32.mrb[0].mxu0
        %v776 = vadd.f32 %v577, %v775
        %v777 = vpop.f32.mrb[0].mxu0
        %778 = vmatprep.mubr.bf16.mxu0 %v677
        %779 = vmatmul.mubr.bf16.gmra.mrb[0].mxu0 %v676
        %v780 = vpop.f32.mrb[0].mxu0
        %v781 = vadd.f32 %v577, %v780
        %v782 = vpop.f32.mrb[0].mxu0
        %v783 = vpop.f32.mrb[0].mxu0
        %v784 = vadd.f32 %v577, %v783
        %v785 = vpop.f32.mrb[0].mxu0
        %786 = vmatprep.mubr.bf16.mxu0 %v679
        %787 = vmatmul.mubr.bf16.gmra.mrb[0].mxu0 %v678
        %v788 = vpop.f32.mrb[0].mxu0
        %v789 = vadd.f32 %v577, %v788
        %v790 = vpop.f32.mrb[0].mxu0
        %v791 = vpop.f32.mrb[0].mxu0
        %v792 = vadd.f32 %v577, %v791
        %v793 = vpop.f32.mrb[0].mxu0
        %794 = vmatprep.mubr.bf16.mxu0 %v681
        %795 = vmatmul.mubr.bf16.gmra.mrb[0].mxu0 %v680
        %v796 = vpop.f32.mrb[0].mxu0
        %v797 = vadd.f32 %v577, %v796
        %v798 = vpop.f32.mrb[0].mxu0
        %v799 = vpop.f32.mrb[0].mxu0
        %v800 = vadd.f32 %v577, %v799
        %v801 = vpop.f32.mrb[0].mxu0
        %802 = vmatprep.mubr.bf16.mxu0 %v683
        %803 = vmatmul.mubr.bf16.gmra.mrb[0].mxu0 %v682
        %v804 = vpop.f32.mrb[0].mxu0
        %v805 = vadd.f32 %v577, %v804
        %v806 = vpop.f32.mrb[0].mxu0
        %v807 = vpop.f32.mrb[0].mxu0
        %v808 = vadd.f32 %v577, %v807
        %v809 = vpop.f32.mrb[0].mxu0
        %810 = vmatprep.mubr.bf16.mxu0 %v685
        %811 = vmatmul.mubr.bf16.gmra.mrb[0].mxu0 %v684
        %v812 = vpop.f32.mrb[0].mxu0
        %v813 = vadd.f32 %v577, %v812
        %v814 = vpop.f32.mrb[0].mxu0
        %v815 = vpop.f32.mrb[0].mxu0
        %v816 = vadd.f32 %v577, %v815
        %v817 = vpop.f32.mrb[0].mxu0
        %818 = vmatprep.mubr.bf16.mxu0 %v687
        %819 = vmatmul.mubr.bf16.gmra.mrb[0].mxu0 %v686
        %v820 = vpop.f32.mrb[0].mxu0
        %v821 = vadd.f32 %v577, %v820
        %v822 = vpop.f32.mrb[0].mxu0
        %v823 = vpop.f32.mrb[0].mxu0
        %v824 = vadd.f32 %v577, %v823
        %v825 = vpop.f32.mrb[0].mxu0
        %826 = vmatprep.mubr.bf16.mxu0 %v689
        %827 = vmatmul.mubr.bf16.gmra.mrb[0].mxu0 %v688
        %v828 = vpop.f32.mrb[0].mxu0
        %v829 = vadd.f32 %v577, %v828
        %v830 = vpop.f32.mrb[0].mxu0
        %v831 = vpop.f32.mrb[0].mxu0
        %v832 = vadd.f32 %v577, %v831
        %v833 = vpop.f32.mrb[0].mxu0
        %834 = vmatprep.mubr.bf16.mxu0 %v691
        %835 = vmatmul.mubr.bf16.gmra.mrb[0].mxu0 %v690
        %v836 = vpop.f32.mrb[0].mxu0
        %v837 = vadd.f32 %v577, %v836
        %v838 = vpop.f32.mrb[0].mxu0
        %v839 = vpop.f32.mrb[0].mxu0
        %v840 = vadd.f32 %v577, %v839
        %v841 = vpop.f32.mrb[0].mxu0
        %842 = vmatprep.mubr.bf16.mxu0 %v693
        %843 = vmatmul.mubr.bf16.gmra.mrb[0].mxu0 %v692
        %v844 = vpop.f32.mrb[0].mxu0
        %v845 = vadd.f32 %v577, %v844
        %v846 = vpop.f32.mrb[0].mxu0
        %v847 = vpop.f32.mrb[0].mxu0
        %v848 = vadd.f32 %v577, %v847
        %v849 = vpop.f32.mrb[0].mxu0
        %850 = vmatprep.mubr.bf16.mxu0 %v695
        %851 = vmatmul.mubr.bf16.gmra.mrb[0].mxu0 %v694
        %v852 = vpop.f32.mrb[0].mxu0
        %v853 = vadd.f32 %v577, %v852
        %v854 = vpop.f32.mrb[0].mxu0
        %v855 = vpop.f32.mrb[0].mxu0
        %v856 = vadd.f32 %v577, %v855
        %v857 = vpop.f32.mrb[0].mxu0
        %858 = vmatprep.mubr.bf16.mxu0 %v697
        %859 = vmatmul.mubr.bf16.gmra.mrb[0].mxu0 %v696
        %v860 = vpop.f32.mrb[0].mxu0
        %v861 = vadd.f32 %v577, %v860
        %v862 = vpop.f32.mrb[0].mxu0
        %v863 = vpop.f32.mrb[0].mxu0
        %v864 = vadd.f32 %v577, %v863
        %v865 = vpop.f32.mrb[0].mxu0
        %866 = vmatprep.mubr.bf16.mxu0 %v699
        %867 = vmatmul.mubr.bf16.gmra.mrb[0].mxu0 %v698
        %v868 = vpop.f32.mrb[0].mxu0
        %v869 = vadd.f32 %v577, %v868
        %v870 = vpop.f32.mrb[0].mxu0
        %v871 = vpop.f32.mrb[0].mxu0
        %v872 = vadd.f32 %v577, %v871
        %v873 = vpop.f32.mrb[0].mxu0
        %874 = vmatprep.mubr.bf16.mxu0 %v701
        %875 = vmatmul.mubr.bf16.gmra.mrb[0].mxu0 %v700
        %v876 = vpop.f32.mrb[0].mxu0
        %v877 = vadd.f32 %v577, %v876
        %v878 = vpop.f32.mrb[0].mxu0
        %v879 = vpop.f32.mrb[0].mxu0
        %v880 = vadd.f32 %v577, %v879
        %v881 = vpop.f32.mrb[0].mxu0
        %882 = vmatprep.mubr.bf16.mxu0 %v703
        %883 = vmatmul.mubr.bf16.gmra.mrb[0].mxu0 %v702
        %v884 = vpop.f32.mrb[0].mxu0
        %v885 = vadd.f32 %v577, %v884
        %v886 = vpop.f32.mrb[0].mxu0
        %v887 = vpop.f32.mrb[0].mxu0
        %v888 = vadd.f32 %v577, %v887
        %v889 = vpop.f32.mrb[0].mxu0
        %890 = vmatprep.mubr.bf16.mxu0 %v705
        %891 = vmatmul.mubr.bf16.gmra.mrb[0].mxu0 %v704
        %v892 = vpop.f32.mrb[0].mxu0
        %v893 = vadd.f32 %v577, %v892
        %v894 = vpop.f32.mrb[0].mxu0
        %v895 = vpop.f32.mrb[0].mxu0
        %v896 = vadd.f32 %v577, %v895
        %v897 = vpop.f32.mrb[0].mxu0
        %898 = vdwg.mxu0
        %v899 = vmax.f32 %v773, 0.0
        %v900 = vmax.f32 %v776, 0.0
        %v901 = vmax.f32 %v781, 0.0
        %v902 = vmax.f32 %v784, 0.0
        %v903 = vmax.f32 %v789, 0.0
        %v904 = vmax.f32 %v792, 0.0
        %v905 = vmax.f32 %v797, 0.0
        %v906 = vmax.f32 %v800, 0.0
        %v907 = vmax.f32 %v805, 0.0
        %v908 = vmax.f32 %v808, 0.0
        %v909 = vmax.f32 %v813, 0.0
        %v910 = vmax.f32 %v816, 0.0
        %v911 = vmax.f32 %v821, 0.0
        %v912 = vmax.f32 %v824, 0.0
        %v913 = vmax.f32 %v829, 0.0
        %v914 = vmax.f32 %v832, 0.0
        %v915 = vmax.f32 %v837, 0.0
        %v916 = vmax.f32 %v840, 0.0
        %v917 = vmax.f32 %v845, 0.0
        %v918 = vmax.f32 %v848, 0.0
        %v919 = vmax.f32 %v853, 0.0
        %v920 = vmax.f32 %v856, 0.0
        %v921 = vmax.f32 %v861, 0.0
        %v922 = vmax.f32 %v864, 0.0
        %v923 = vmax.f32 %v869, 0.0
        %v924 = vmax.f32 %v872, 0.0
        %v925 = vmax.f32 %v877, 0.0
        %v926 = vmax.f32 %v880, 0.0
        %v927 = vmax.f32 %v885, 0.0
        %v928 = vmax.f32 %v888, 0.0
        %v929 = vmax.f32 %v893, 0.0
        %v930 = vmax.f32 %v896, 0.0
        %v931 = vpack.c.bf16 %v900, %v899
        %v932 = vpack.c.bf16 %v902, %v901
        %v933 = vpack.c.bf16 %v904, %v903
        %v934 = vpack.c.bf16 %v906, %v905
        %v935 = vpack.c.bf16 %v908, %v907
        %v936 = vpack.c.bf16 %v910, %v909
        %v937 = vpack.c.bf16 %v912, %v911
        %v938 = vpack.c.bf16 %v914, %v913
        %v939 = vpack.c.bf16 %v916, %v915
        %v940 = vpack.c.bf16 %v918, %v917
        %v941 = vpack.c.bf16 %v920, %v919
        %v942 = vpack.c.bf16 %v922, %v921
        %v943 = vpack.c.bf16 %v924, %v923
        %v944 = vpack.c.bf16 %v926, %v925
        %v945 = vpack.c.bf16 %v928, %v927
        %v946 = vpack.c.bf16 %v930, %v929
        %v963 = vunpack.c.l.b16 %v228
        %v964 = vunpack.c.l.b16 %v229
        %v965 = vunpack.c.l.b16 %v230
        %v966 = vunpack.c.l.b16 %v231
        %v967 = vunpack.c.l.b16 %v232
        %v968 = vunpack.c.l.b16 %v233
        %v969 = vunpack.c.l.b16 %v234
        %v970 = vunpack.c.l.b16 %v235
        %v971 = vunpack.c.l.b16 %v236
        %v972 = vunpack.c.l.b16 %v237
        %v973 = vunpack.c.l.b16 %v238
        %v974 = vunpack.c.l.b16 %v239
        %v975 = vunpack.c.l.b16 %v240
        %v976 = vunpack.c.l.b16 %v241
        %v977 = vunpack.c.l.b16 %v242
        %v978 = vunpack.c.l.b16 %v243
        %v979 = vpack.c.b16 %v964, %v963
        %v980 = vpack.c.b16 %v966, %v965
        %v981 = vpack.c.b16 %v968, %v967
        %v982 = vpack.c.b16 %v970, %v969
        %v983 = vpack.c.b16 %v972, %v971
        %v984 = vpack.c.b16 %v974, %v973
        %v985 = vpack.c.b16 %v976, %v975
        %v986 = vpack.c.b16 %v978, %v977
        %995 = vmatprep.subr.bf16.mxu0 0
        %996 = vmatpush1.bf16.msra.mxu0 %v979
        %997 = vmatprep.subr.bf16.mxu0 0
        %998 = vmatpush1.bf16.msra.mxu0 %v980
        %999 = vmatprep.subr.bf16.mxu0 0
        %1000 = vmatpush1.bf16.msra.mxu0 %v981
        %1001 = vmatprep.subr.bf16.mxu0 0
        %1002 = vmatpush1.bf16.msra.mxu0 %v982
        %1003 = vmatprep.subr.bf16.mxu0 0
        %1004 = vmatpush1.bf16.msra.mxu0 %v983
        %1005 = vmatprep.subr.bf16.mxu0 0
        %1006 = vmatpush1.bf16.msra.mxu0 %v984
        %1007 = vmatprep.subr.bf16.mxu0 0
        %1008 = vmatpush1.bf16.msra.mxu0 %v985
        %1009 = vmatprep.subr.bf16.mxu0 0
        %1010 = vmatpush1.bf16.msra.mxu0 %v986
        %1011 = vmatprep.subr.bf16.mxu0 0
        %1012 = vmatpush1.bf16.msra.mxu0 0
        %1013 = vmatprep.subr.bf16.mxu0 0
        %1014 = vmatpush1.bf16.msra.mxu0 0
        %1015 = vmatprep.subr.bf16.mxu0 0
        %1016 = vmatpush1.bf16.msra.mxu0 0
        %1017 = vmatprep.subr.bf16.mxu0 0
        %1018 = vmatpush1.bf16.msra.mxu0 0
        %1019 = vmatprep.subr.bf16.mxu0 0
        %1020 = vmatpush1.bf16.msra.mxu0 0
        %1021 = vmatprep.subr.bf16.mxu0 0
        %1022 = vmatpush1.bf16.msra.mxu0 0
        %1023 = vmatprep.subr.bf16.mxu0 0
        %1024 = vmatpush1.bf16.msra.mxu0 0
        %1025 = vmatprep.subr.bf16.mxu0 0
        %1026 = vmatpush1.bf16.msra.mxu0 0
        %1027 = vmatprep.mubr.bf16.mxu0 0
        %1028 = vmatmul.mubr.bf16.gmra.mrb[0].mxu0 %v931
        %v1029 = vpop.f32.mrb[0].mxu0
        %v1030 = vadd.f32 0.0, %v1029
        %v1031 = vpop.f32.mrb[0].mxu0
        %v1032 = vpop.f32.mrb[0].mxu0
        %v1033 = vadd.f32 0.0, %v1032
        %v1034 = vpop.f32.mrb[0].mxu0
        %1035 = vmatprep.mubr.bf16.mxu0 0
        %1036 = vmatmul.mubr.bf16.gmra.mrb[0].mxu0 %v932
        %v1037 = vpop.f32.mrb[0].mxu0
        %v1038 = vadd.f32 0.0, %v1037
        %v1039 = vpop.f32.mrb[0].mxu0
        %v1040 = vpop.f32.mrb[0].mxu0
        %v1041 = vadd.f32 0.0, %v1040
        %v1042 = vpop.f32.mrb[0].mxu0
        %1043 = vmatprep.mubr.bf16.mxu0 0
        %1044 = vmatmul.mubr.bf16.gmra.mrb[0].mxu0 %v933
        %v1045 = vpop.f32.mrb[0].mxu0
        %v1046 = vadd.f32 0.0, %v1045
        %v1047 = vpop.f32.mrb[0].mxu0
        %v1048 = vpop.f32.mrb[0].mxu0
        %v1049 = vadd.f32 0.0, %v1048
        %v1050 = vpop.f32.mrb[0].mxu0
        %1051 = vmatprep.mubr.bf16.mxu0 0
        %1052 = vmatmul.mubr.bf16.gmra.mrb[0].mxu0 %v934
        %v1053 = vpop.f32.mrb[0].mxu0
        %v1054 = vadd.f32 0.0, %v1053
        %v1055 = vpop.f32.mrb[0].mxu0
        %v1056 = vpop.f32.mrb[0].mxu0
        %v1057 = vadd.f32 0.0, %v1056
        %v1058 = vpop.f32.mrb[0].mxu0
        %1059 = vmatprep.mubr.bf16.mxu0 0
        %1060 = vmatmul.mubr.bf16.gmra.mrb[0].mxu0 %v935
        %v1061 = vpop.f32.mrb[0].mxu0
        %v1062 = vadd.f32 0.0, %v1061
        %v1063 = vpop.f32.mrb[0].mxu0
        %v1064 = vpop.f32.mrb[0].mxu0
        %v1065 = vadd.f32 0.0, %v1064
        %v1066 = vpop.f32.mrb[0].mxu0
        %1067 = vmatprep.mubr.bf16.mxu0 0
        %1068 = vmatmul.mubr.bf16.gmra.mrb[0].mxu0 %v936
        %v1069 = vpop.f32.mrb[0].mxu0
        %v1070 = vadd.f32 0.0, %v1069
        %v1071 = vpop.f32.mrb[0].mxu0
        %v1072 = vpop.f32.mrb[0].mxu0
        %v1073 = vadd.f32 0.0, %v1072
        %v1074 = vpop.f32.mrb[0].mxu0
        %1075 = vmatprep.mubr.bf16.mxu0 0
        %1076 = vmatmul.mubr.bf16.gmra.mrb[0].mxu0 %v937
        %v1077 = vpop.f32.mrb[0].mxu0
        %v1078 = vadd.f32 0.0, %v1077
        %v1079 = vpop.f32.mrb[0].mxu0
        %v1080 = vpop.f32.mrb[0].mxu0
        %v1081 = vadd.f32 0.0, %v1080
        %v1082 = vpop.f32.mrb[0].mxu0
        %1083 = vmatprep.mubr.bf16.mxu0 0
        %1084 = vmatmul.mubr.bf16.gmra.mrb[0].mxu0 %v938
        %v1085 = vpop.f32.mrb[0].mxu0
        %v1086 = vadd.f32 0.0, %v1085
        %v1087 = vpop.f32.mrb[0].mxu0
        %v1088 = vpop.f32.mrb[0].mxu0
        %v1089 = vadd.f32 0.0, %v1088
        %v1090 = vpop.f32.mrb[0].mxu0
        %1091 = vmatprep.mubr.bf16.mxu0 0
        %1092 = vmatmul.mubr.bf16.gmra.mrb[0].mxu0 %v939
        %v1093 = vpop.f32.mrb[0].mxu0
        %v1094 = vadd.f32 0.0, %v1093
        %v1095 = vpop.f32.mrb[0].mxu0
        %v1096 = vpop.f32.mrb[0].mxu0
        %v1097 = vadd.f32 0.0, %v1096
        %v1098 = vpop.f32.mrb[0].mxu0
        %1099 = vmatprep.mubr.bf16.mxu0 0
        %1100 = vmatmul.mubr.bf16.gmra.mrb[0].mxu0 %v940
        %v1101 = vpop.f32.mrb[0].mxu0
        %v1102 = vadd.f32 0.0, %v1101
        %v1103 = vpop.f32.mrb[0].mxu0
        %v1104 = vpop.f32.mrb[0].mxu0
        %v1105 = vadd.f32 0.0, %v1104
        %v1106 = vpop.f32.mrb[0].mxu0
        %1107 = vmatprep.mubr.bf16.mxu0 0
        %1108 = vmatmul.mubr.bf16.gmra.mrb[0].mxu0 %v941
        %v1109 = vpop.f32.mrb[0].mxu0
        %v1110 = vadd.f32 0.0, %v1109
        %v1111 = vpop.f32.mrb[0].mxu0
        %v1112 = vpop.f32.mrb[0].mxu0
        %v1113 = vadd.f32 0.0, %v1112
        %v1114 = vpop.f32.mrb[0].mxu0
        %1115 = vmatprep.mubr.bf16.mxu0 0
        %1116 = vmatmul.mubr.bf16.gmra.mrb[0].mxu0 %v942
        %v1117 = vpop.f32.mrb[0].mxu0
        %v1118 = vadd.f32 0.0, %v1117
        %v1119 = vpop.f32.mrb[0].mxu0
        %v1120 = vpop.f32.mrb[0].mxu0
        %v1121 = vadd.f32 0.0, %v1120
        %v1122 = vpop.f32.mrb[0].mxu0
        %1123 = vmatprep.mubr.bf16.mxu0 0
        %1124 = vmatmul.mubr.bf16.gmra.mrb[0].mxu0 %v943
        %v1125 = vpop.f32.mrb[0].mxu0
        %v1126 = vadd.f32 0.0, %v1125
        %v1127 = vpop.f32.mrb[0].mxu0
        %v1128 = vpop.f32.mrb[0].mxu0
        %v1129 = vadd.f32 0.0, %v1128
        %v1130 = vpop.f32.mrb[0].mxu0
        %1131 = vmatprep.mubr.bf16.mxu0 0
        %1132 = vmatmul.mubr.bf16.gmra.mrb[0].mxu0 %v944
        %v1133 = vpop.f32.mrb[0].mxu0
        %v1134 = vadd.f32 0.0, %v1133
        %v1135 = vpop.f32.mrb[0].mxu0
        %v1136 = vpop.f32.mrb[0].mxu0
        %v1137 = vadd.f32 0.0, %v1136
        %v1138 = vpop.f32.mrb[0].mxu0
        %1139 = vmatprep.mubr.bf16.mxu0 0
        %1140 = vmatmul.mubr.bf16.gmra.mrb[0].mxu0 %v945
        %v1141 = vpop.f32.mrb[0].mxu0
        %v1142 = vadd.f32 0.0, %v1141
        %v1143 = vpop.f32.mrb[0].mxu0
        %v1144 = vpop.f32.mrb[0].mxu0
        %v1145 = vadd.f32 0.0, %v1144
        %v1146 = vpop.f32.mrb[0].mxu0
        %1147 = vmatprep.mubr.bf16.mxu0 0
        %1148 = vmatmul.mubr.bf16.gmra.mrb[0].mxu0 %v946
        %v1149 = vpop.f32.mrb[0].mxu0
        %v1150 = vadd.f32 0.0, %v1149
        %v1151 = vpop.f32.mrb[0].mxu0
        %v1152 = vpop.f32.mrb[0].mxu0
        %v1153 = vadd.f32 0.0, %v1152
        %v1154 = vpop.f32.mrb[0].mxu0
        %1155 = vdwg.mxu0
        %v1156 = vpack.c.bf16 %v1033, %v1030
        %v1157 = vpack.c.bf16 %v1041, %v1038
        %v1158 = vpack.c.bf16 %v1049, %v1046
        %v1159 = vpack.c.bf16 %v1057, %v1054
        %v1160 = vpack.c.bf16 %v1065, %v1062
        %v1161 = vpack.c.bf16 %v1073, %v1070
        %v1162 = vpack.c.bf16 %v1081, %v1078
        %v1163 = vpack.c.bf16 %v1089, %v1086
        %v1164 = vpack.c.bf16 %v1097, %v1094
        %v1165 = vpack.c.bf16 %v1105, %v1102
        %v1166 = vpack.c.bf16 %v1113, %v1110
        %v1167 = vpack.c.bf16 %v1121, %v1118
        %v1168 = vpack.c.bf16 %v1129, %v1126
        %v1169 = vpack.c.bf16 %v1137, %v1134
        %v1170 = vpack.c.bf16 %v1145, %v1142
        %v1171 = vpack.c.bf16 %v1153, %v1150
        %v1172 = vlaneseq
        %v1173 = vshrl.u32 %v1172, 7
        %v1174 = vsub.s32 1, %v1173
        %v1175 = vrot.slane %v227, %v1174
        %1176 = vmatprep.subr.bf16.mxu0 0
        %1177 = vmatpush1.bf16.msra.mxu0 %v1156
        %1178 = vmatprep.subr.bf16.mxu0 0
        %1179 = vmatpush1.bf16.msra.mxu0 %v1157
        %1180 = vmatprep.subr.bf16.mxu0 0
        %1181 = vmatpush1.bf16.msra.mxu0 %v1158
        %1182 = vmatprep.subr.bf16.mxu0 0
        %1183 = vmatpush1.bf16.msra.mxu0 %v1159
        %1184 = vmatprep.subr.bf16.mxu0 0
        %1185 = vmatpush1.bf16.msra.mxu0 %v1160
        %1186 = vmatprep.subr.bf16.mxu0 0
        %1187 = vmatpush1.bf16.msra.mxu0 %v1161
        %1188 = vmatprep.subr.bf16.mxu0 0
        %1189 = vmatpush1.bf16.msra.mxu0 %v1162
        %1190 = vmatprep.subr.bf16.mxu0 0
        %1191 = vmatpush1.bf16.msra.mxu0 %v1163
        %1192 = vmatprep.subr.bf16.mxu0 0
        %1193 = vmatpush1.bf16.msra.mxu0 %v1164
        %1194 = vmatprep.subr.bf16.mxu0 0
        %1195 = vmatpush1.bf16.msra.mxu0 %v1165
        %1196 = vmatprep.subr.bf16.mxu0 0
        %1197 = vmatpush1.bf16.msra.mxu0 %v1166
        %1198 = vmatprep.subr.bf16.mxu0 0
        %1199 = vmatpush1.bf16.msra.mxu0 %v1167
        %1200 = vmatprep.subr.bf16.mxu0 0
        %1201 = vmatpush1.bf16.msra.mxu0 %v1168
        %1202 = vmatprep.subr.bf16.mxu0 0
        %1203 = vmatpush1.bf16.msra.mxu0 %v1169
        %1204 = vmatprep.subr.bf16.mxu0 0
        %1205 = vmatpush1.bf16.msra.mxu0 %v1170
        %1206 = vmatprep.subr.bf16.mxu0 0
        %1207 = vmatpush1.bf16.msra.mxu0 %v1171
        %1208 = vmatprep.mubr.bf16.mxu0 %v675
        %1209 = vmatmul.mubr.bf16.gmra.mrb[0].mxu0 %v674
        %v1210 = vpop.f32.mrb[0].mxu0
        %v1211 = vadd.f32 %v1175, %v1210
        %v1212 = vpop.f32.mrb[0].mxu0
        %v1213 = vpop.f32.mrb[0].mxu0
        %v1214 = vadd.f32 %v1175, %v1213
        %v1215 = vpop.f32.mrb[0].mxu0
        %1216 = vmatprep.mubr.bf16.mxu0 %v677
        %1217 = vmatmul.mubr.bf16.gmra.mrb[0].mxu0 %v676
        %v1218 = vpop.f32.mrb[0].mxu0
        %v1219 = vadd.f32 %v1175, %v1218
        %v1220 = vpop.f32.mrb[0].mxu0
        %v1221 = vpop.f32.mrb[0].mxu0
        %v1222 = vadd.f32 %v1175, %v1221
        %v1223 = vpop.f32.mrb[0].mxu0
        %1224 = vmatprep.mubr.bf16.mxu0 %v679
        %1225 = vmatmul.mubr.bf16.gmra.mrb[0].mxu0 %v678
        %v1226 = vpop.f32.mrb[0].mxu0
        %v1227 = vadd.f32 %v1175, %v1226
        %v1228 = vpop.f32.mrb[0].mxu0
        %v1229 = vpop.f32.mrb[0].mxu0
        %v1230 = vadd.f32 %v1175, %v1229
        %v1231 = vpop.f32.mrb[0].mxu0
        %1232 = vmatprep.mubr.bf16.mxu0 %v681
        %1233 = vmatmul.mubr.bf16.gmra.mrb[0].mxu0 %v680
        %v1234 = vpop.f32.mrb[0].mxu0
        %v1235 = vadd.f32 %v1175, %v1234
        %v1236 = vpop.f32.mrb[0].mxu0
        %v1237 = vpop.f32.mrb[0].mxu0
        %v1238 = vadd.f32 %v1175, %v1237
        %v1239 = vpop.f32.mrb[0].mxu0
        %1240 = vmatprep.mubr.bf16.mxu0 %v683
        %1241 = vmatmul.mubr.bf16.gmra.mrb[0].mxu0 %v682
        %v1242 = vpop.f32.mrb[0].mxu0
        %v1243 = vadd.f32 %v1175, %v1242
        %v1244 = vpop.f32.mrb[0].mxu0
        %v1245 = vpop.f32.mrb[0].mxu0
        %v1246 = vadd.f32 %v1175, %v1245
        %v1247 = vpop.f32.mrb[0].mxu0
        %1248 = vmatprep.mubr.bf16.mxu0 %v685
        %1249 = vmatmul.mubr.bf16.gmra.mrb[0].mxu0 %v684
        %v1250 = vpop.f32.mrb[0].mxu0
        %v1251 = vadd.f32 %v1175, %v1250
        %v1252 = vpop.f32.mrb[0].mxu0
        %v1253 = vpop.f32.mrb[0].mxu0
        %v1254 = vadd.f32 %v1175, %v1253
        %v1255 = vpop.f32.mrb[0].mxu0
        %1256 = vmatprep.mubr.bf16.mxu0 %v687
        %1257 = vmatmul.mubr.bf16.gmra.mrb[0].mxu0 %v686
        %v1258 = vpop.f32.mrb[0].mxu0
        %v1259 = vadd.f32 %v1175, %v1258
        %v1260 = vpop.f32.mrb[0].mxu0
        %v1261 = vpop.f32.mrb[0].mxu0
        %v1262 = vadd.f32 %v1175, %v1261
        %v1263 = vpop.f32.mrb[0].mxu0
        %1264 = vmatprep.mubr.bf16.mxu0 %v689
        %1265 = vmatmul.mubr.bf16.gmra.mrb[0].mxu0 %v688
        %v1266 = vpop.f32.mrb[0].mxu0
        %v1267 = vadd.f32 %v1175, %v1266
        %v1268 = vpop.f32.mrb[0].mxu0
        %v1269 = vpop.f32.mrb[0].mxu0
        %v1270 = vadd.f32 %v1175, %v1269
        %v1271 = vpop.f32.mrb[0].mxu0
        %1272 = vmatprep.mubr.bf16.mxu0 %v691
        %1273 = vmatmul.mubr.bf16.gmra.mrb[0].mxu0 %v690
        %v1274 = vpop.f32.mrb[0].mxu0
        %v1275 = vadd.f32 %v1175, %v1274
        %v1276 = vpop.f32.mrb[0].mxu0
        %v1277 = vpop.f32.mrb[0].mxu0
        %v1278 = vadd.f32 %v1175, %v1277
        %v1279 = vpop.f32.mrb[0].mxu0
        %1280 = vmatprep.mubr.bf16.mxu0 %v693
        %1281 = vmatmul.mubr.bf16.gmra.mrb[0].mxu0 %v692
        %v1282 = vpop.f32.mrb[0].mxu0
        %v1283 = vadd.f32 %v1175, %v1282
        %v1284 = vpop.f32.mrb[0].mxu0
        %v1285 = vpop.f32.mrb[0].mxu0
        %v1286 = vadd.f32 %v1175, %v1285
        %v1287 = vpop.f32.mrb[0].mxu0
        %1288 = vmatprep.mubr.bf16.mxu0 %v695
        %1289 = vmatmul.mubr.bf16.gmra.mrb[0].mxu0 %v694
        %v1290 = vpop.f32.mrb[0].mxu0
        %v1291 = vadd.f32 %v1175, %v1290
        %v1292 = vpop.f32.mrb[0].mxu0
        %v1293 = vpop.f32.mrb[0].mxu0
        %v1294 = vadd.f32 %v1175, %v1293
        %v1295 = vpop.f32.mrb[0].mxu0
        %1296 = vmatprep.mubr.bf16.mxu0 %v697
        %1297 = vmatmul.mubr.bf16.gmra.mrb[0].mxu0 %v696
        %v1298 = vpop.f32.mrb[0].mxu0
        %v1299 = vadd.f32 %v1175, %v1298
        %v1300 = vpop.f32.mrb[0].mxu0
        %v1301 = vpop.f32.mrb[0].mxu0
        %v1302 = vadd.f32 %v1175, %v1301
        %v1303 = vpop.f32.mrb[0].mxu0
        %1304 = vmatprep.mubr.bf16.mxu0 %v699
        %1305 = vmatmul.mubr.bf16.gmra.mrb[0].mxu0 %v698
        %v1306 = vpop.f32.mrb[0].mxu0
        %v1307 = vadd.f32 %v1175, %v1306
        %v1308 = vpop.f32.mrb[0].mxu0
        %v1309 = vpop.f32.mrb[0].mxu0
        %v1310 = vadd.f32 %v1175, %v1309
        %v1311 = vpop.f32.mrb[0].mxu0
        %1312 = vmatprep.mubr.bf16.mxu0 %v701
        %1313 = vmatmul.mubr.bf16.gmra.mrb[0].mxu0 %v700
        %v1314 = vpop.f32.mrb[0].mxu0
        %v1315 = vadd.f32 %v1175, %v1314
        %v1316 = vpop.f32.mrb[0].mxu0
        %v1317 = vpop.f32.mrb[0].mxu0
        %v1318 = vadd.f32 %v1175, %v1317
        %v1319 = vpop.f32.mrb[0].mxu0
        %1320 = vmatprep.mubr.bf16.mxu0 %v703
        %1321 = vmatmul.mubr.bf16.gmra.mrb[0].mxu0 %v702
        %v1322 = vpop.f32.mrb[0].mxu0
        %v1323 = vadd.f32 %v1175, %v1322
        %v1324 = vpop.f32.mrb[0].mxu0
        %v1325 = vpop.f32.mrb[0].mxu0
        %v1326 = vadd.f32 %v1175, %v1325
        %v1327 = vpop.f32.mrb[0].mxu0
        %1328 = vmatprep.mubr.bf16.mxu0 %v705
        %1329 = vmatmul.mubr.bf16.gmra.mrb[0].mxu0 %v704
        %v1330 = vpop.f32.mrb[0].mxu0
        %v1331 = vadd.f32 %v1175, %v1330
        %v1332 = vpop.f32.mrb[0].mxu0
        %v1333 = vpop.f32.mrb[0].mxu0
        %v1334 = vadd.f32 %v1175, %v1333
        %v1335 = vpop.f32.mrb[0].mxu0
        %1336 = vdwg.mxu0
        %v1337 = vmax.f32 %v1211, 0.0
        %v1338 = vmax.f32 %v1214, 0.0
        %v1339 = vmax.f32 %v1219, 0.0
        %v1340 = vmax.f32 %v1222, 0.0
        %v1341 = vmax.f32 %v1227, 0.0
        %v1342 = vmax.f32 %v1230, 0.0
        %v1343 = vmax.f32 %v1235, 0.0
        %v1344 = vmax.f32 %v1238, 0.0
        %v1345 = vmax.f32 %v1243, 0.0
        %v1346 = vmax.f32 %v1246, 0.0
        %v1347 = vmax.f32 %v1251, 0.0
        %v1348 = vmax.f32 %v1254, 0.0
        %v1349 = vmax.f32 %v1259, 0.0
        %v1350 = vmax.f32 %v1262, 0.0
        %v1351 = vmax.f32 %v1267, 0.0
        %v1352 = vmax.f32 %v1270, 0.0
        %v1353 = vmax.f32 %v1275, 0.0
        %v1354 = vmax.f32 %v1278, 0.0
        %v1355 = vmax.f32 %v1283, 0.0
        %v1356 = vmax.f32 %v1286, 0.0
        %v1357 = vmax.f32 %v1291, 0.0
        %v1358 = vmax.f32 %v1294, 0.0
        %v1359 = vmax.f32 %v1299, 0.0
        %v1360 = vmax.f32 %v1302, 0.0
        %v1361 = vmax.f32 %v1307, 0.0
        %v1362 = vmax.f32 %v1310, 0.0
        %v1363 = vmax.f32 %v1315, 0.0
        %v1364 = vmax.f32 %v1318, 0.0
        %v1365 = vmax.f32 %v1323, 0.0
        %v1366 = vmax.f32 %v1326, 0.0
        %v1367 = vmax.f32 %v1331, 0.0
        %v1368 = vmax.f32 %v1334, 0.0
        %v1369 = vpack.c.bf16 %v1338, %v1337
        %v1370 = vpack.c.bf16 %v1340, %v1339
        %v1371 = vpack.c.bf16 %v1342, %v1341
        %v1372 = vpack.c.bf16 %v1344, %v1343
        %v1373 = vpack.c.bf16 %v1346, %v1345
        %v1374 = vpack.c.bf16 %v1348, %v1347
        %v1375 = vpack.c.bf16 %v1350, %v1349
        %v1376 = vpack.c.bf16 %v1352, %v1351
        %v1377 = vpack.c.bf16 %v1354, %v1353
        %v1378 = vpack.c.bf16 %v1356, %v1355
        %v1379 = vpack.c.bf16 %v1358, %v1357
        %v1380 = vpack.c.bf16 %v1360, %v1359
        %v1381 = vpack.c.bf16 %v1362, %v1361
        %v1382 = vpack.c.bf16 %v1364, %v1363
        %v1383 = vpack.c.bf16 %v1366, %v1365
        %v1384 = vpack.c.bf16 %v1368, %v1367
        %v1389 = vunpack.c.l.b16 %v260
        %v1390 = vunpack.c.h.b16 %v260
        %v1391 = vunpack.c.l.b16 %v261
        %v1392 = vunpack.c.h.b16 %v261
        %v1393 = vunpack.c.l.b16 %v262
        %v1394 = vunpack.c.h.b16 %v262
        %v1395 = vunpack.c.l.b16 %v263
        %v1396 = vunpack.c.h.b16 %v263
        %v1397 = vpack.c.b16 %v1391, %v1389
        %v1398 = vpack.c.b16 %v1392, %v1390
        %v1399 = vpack.c.b16 %v1395, %v1393
        %v1400 = vpack.c.b16 %v1396, %v1394
        %1405 = vmatprep.subr.bf16.mxu0 0
        %1406 = vmatpush1.bf16.msra.mxu0 %v1369
        %1407 = vmatprep.subr.bf16.mxu0 0
        %1408 = vmatpush1.bf16.msra.mxu0 %v1370
        %1409 = vmatprep.subr.bf16.mxu0 0
        %1410 = vmatpush1.bf16.msra.mxu0 %v1371
        %1411 = vmatprep.subr.bf16.mxu0 0
        %1412 = vmatpush1.bf16.msra.mxu0 %v1372
        %1413 = vmatprep.subr.bf16.mxu0 0
        %1414 = vmatpush1.bf16.msra.mxu0 %v1373
        %1415 = vmatprep.subr.bf16.mxu0 0
        %1416 = vmatpush1.bf16.msra.mxu0 %v1374
        %1417 = vmatprep.subr.bf16.mxu0 0
        %1418 = vmatpush1.bf16.msra.mxu0 %v1375
        %1419 = vmatprep.subr.bf16.mxu0 0
        %1420 = vmatpush1.bf16.msra.mxu0 %v1376
        %1421 = vmatprep.subr.bf16.mxu0 0
        %1422 = vmatpush1.bf16.msra.mxu0 %v1377
        %1423 = vmatprep.subr.bf16.mxu0 0
        %1424 = vmatpush1.bf16.msra.mxu0 %v1378
        %1425 = vmatprep.subr.bf16.mxu0 0
        %1426 = vmatpush1.bf16.msra.mxu0 %v1379
        %1427 = vmatprep.subr.bf16.mxu0 0
        %1428 = vmatpush1.bf16.msra.mxu0 %v1380
        %1429 = vmatprep.subr.bf16.mxu0 0
        %1430 = vmatpush1.bf16.msra.mxu0 %v1381
        %1431 = vmatprep.subr.bf16.mxu0 0
        %1432 = vmatpush1.bf16.msra.mxu0 %v1382
        %1433 = vmatprep.subr.bf16.mxu0 0
        %1434 = vmatpush1.bf16.msra.mxu0 %v1383
        %1435 = vmatprep.subr.bf16.mxu0 0
        %1436 = vmatpush1.bf16.msra.mxu0 %v1384
        %1437 = vmatprep.mubr.bf16.mxu0 %v1398
        %1438 = vmatmul.mubr.bf16.gmra.mrb[0].mxu0 %v1397
        %v1439 = vpop.f32.mrb[0].mxu0
        %v1440 = vadd.f32 0.0, %v1439
        %v1441 = vpop.f32.mrb[0].mxu0
        %v1442 = vpop.f32.mrb[0].mxu0
        %v1443 = vadd.f32 0.0, %v1442
        %v1444 = vpop.f32.mrb[0].mxu0
        %1445 = vmatprep.mubr.bf16.mxu0 %v1400
        %1446 = vmatmul.mubr.bf16.gmra.mrb[0].mxu0 %v1399
        %v1447 = vpop.f32.mrb[0].mxu0
        %v1448 = vadd.f32 0.0, %v1447
        %v1449 = vpop.f32.mrb[0].mxu0
        %v1450 = vpop.f32.mrb[0].mxu0
        %v1451 = vadd.f32 0.0, %v1450
        %v1452 = vpop.f32.mrb[0].mxu0
        %1453 = vdwg.mxu0
        %v1454 = vpack.c.bf16 %v1443, %v1440
        %v1455 = vpack.c.bf16 %v1451, %v1448
        %v1456 = vlaneseq
        %v1457 = vshrl.u32 %v1456, 7
        %v1458 = vsub.s32 2, %v1457
        %v1459 = vrot.slane %v227, %v1458
        %v1476 = vunpack.c.l.b16 %v244
        %v1477 = vunpack.c.l.b16 %v245
        %v1478 = vunpack.c.l.b16 %v246
        %v1479 = vunpack.c.l.b16 %v247
        %v1480 = vunpack.c.l.b16 %v248
        %v1481 = vunpack.c.l.b16 %v249
        %v1482 = vunpack.c.l.b16 %v250
        %v1483 = vunpack.c.l.b16 %v251
        %v1484 = vunpack.c.l.b16 %v252
        %v1485 = vunpack.c.l.b16 %v253
        %v1486 = vunpack.c.l.b16 %v254
        %v1487 = vunpack.c.l.b16 %v255
        %v1488 = vunpack.c.l.b16 %v256
        %v1489 = vunpack.c.l.b16 %v257
        %v1490 = vunpack.c.l.b16 %v258
        %v1491 = vunpack.c.l.b16 %v259
        %v1492 = vpack.c.b16 %v1477, %v1476
        %v1493 = vpack.c.b16 %v1479, %v1478
        %v1494 = vpack.c.b16 %v1481, %v1480
        %v1495 = vpack.c.b16 %v1483, %v1482
        %v1496 = vpack.c.b16 %v1485, %v1484
        %v1497 = vpack.c.b16 %v1487, %v1486
        %v1498 = vpack.c.b16 %v1489, %v1488
        %v1499 = vpack.c.b16 %v1491, %v1490
        %1508 = vmatprep.subr.bf16.mxu0 0
        %1509 = vmatpush1.bf16.msra.mxu0 %v1492
        %1510 = vmatprep.subr.bf16.mxu0 0
        %1511 = vmatpush1.bf16.msra.mxu0 %v1493
        %1512 = vmatprep.subr.bf16.mxu0 0
        %1513 = vmatpush1.bf16.msra.mxu0 %v1494
        %1514 = vmatprep.subr.bf16.mxu0 0
        %1515 = vmatpush1.bf16.msra.mxu0 %v1495
        %1516 = vmatprep.subr.bf16.mxu0 0
        %1517 = vmatpush1.bf16.msra.mxu0 %v1496
        %1518 = vmatprep.subr.bf16.mxu0 0
        %1519 = vmatpush1.bf16.msra.mxu0 %v1497
        %1520 = vmatprep.subr.bf16.mxu0 0
        %1521 = vmatpush1.bf16.msra.mxu0 %v1498
        %1522 = vmatprep.subr.bf16.mxu0 0
        %1523 = vmatpush1.bf16.msra.mxu0 %v1499
        %1524 = vmatprep.subr.bf16.mxu0 0
        %1525 = vmatpush1.bf16.msra.mxu0 0
        %1526 = vmatprep.subr.bf16.mxu0 0
        %1527 = vmatpush1.bf16.msra.mxu0 0
        %1528 = vmatprep.subr.bf16.mxu0 0
        %1529 = vmatpush1.bf16.msra.mxu0 0
        %1530 = vmatprep.subr.bf16.mxu0 0
        %1531 = vmatpush1.bf16.msra.mxu0 0
        %1532 = vmatprep.subr.bf16.mxu0 0
        %1533 = vmatpush1.bf16.msra.mxu0 0
        %1534 = vmatprep.subr.bf16.mxu0 0
        %1535 = vmatpush1.bf16.msra.mxu0 0
        %1536 = vmatprep.subr.bf16.mxu0 0
        %1537 = vmatpush1.bf16.msra.mxu0 0
        %1538 = vmatprep.subr.bf16.mxu0 0
        %1539 = vmatpush1.bf16.msra.mxu0 0
        %1540 = vmatprep.mubr.bf16.mxu0 0
        %1541 = vmatmul.mubr.bf16.gmra.mrb[0].mxu0 %v1454
        %v1542 = vpop.f32.mrb[0].mxu0
        %v1543 = vadd.f32 %v1459, %v1542
        %v1544 = vpop.f32.mrb[0].mxu0
        %v1545 = vpop.f32.mrb[0].mxu0
        %v1546 = vadd.f32 %v1459, %v1545
        %v1547 = vpop.f32.mrb[0].mxu0
        %1548 = vmatprep.mubr.bf16.mxu0 0
        %1549 = vmatmul.mubr.bf16.gmra.mrb[0].mxu0 %v1455
        %v1550 = vpop.f32.mrb[0].mxu0
        %v1551 = vadd.f32 %v1459, %v1550
        %v1552 = vpop.f32.mrb[0].mxu0
        %v1553 = vpop.f32.mrb[0].mxu0
        %v1554 = vadd.f32 %v1459, %v1553
        %v1555 = vpop.f32.mrb[0].mxu0
        %1556 = vdwg.mxu0
        %1557 = vst [vmem:[%s152] sm:$0xff] %v1543
        %1558 = vst [vmem:[%s152 + $0x8] sm:$0xff] %v1546
        %1559 = vst [vmem:[%s152 + $0x10] sm:$0xff] %v1551
        %1560 = vst [vmem:[%s152 + $0x18] sm:$0xff] %v1554
        %s1561 = sand.u32 %s72, 1
        %s1562 = scalar_lea.sflag [#allocation4], %s1561
        %s1563 = sand.u32 %s72, 1
        %s1564 = smul.addr %s1563, 32
        %s1565 = scalar_lea.vmem [#allocation5], %s1564
        // Predicated region
        $region33: #{tpu_custom_call.1} parent=27 // pred_check
          %p1566 = pneg %p82
        $region34: #{tpu_custom_call.1} parent=27 // pred_check_branch
          %1568 = sbr.rel (%p1566) target = $region36
        $region35: #{tpu_custom_call.1} parent=27 // pred_region
          %s1569 = smul.u32 4, %s17
          %s1571 = ssub.s32 512, 512
          %1572 = vsyncadd %s1562, %s1571
          %s1573 = smul.addr %s1569, 128
          %s1574 = scalar_lea.hbm %s2, %s1573
          %s1575 = sshll.u32 %s1565, 4
          %s1576 = int_to_ptr.vmem [resolvable:$true] %s1575
          %1581 = dma.vmem_to_hbm [thread:$0]  %s1576, 512, %s1574, %s1562, 128, 128, 8
        $region36: #{tpu_custom_call.1} parent=27 // pred_fallthru
          _
      $region28: #{tpu_custom_call.1} parent=5 // pred_fallthru
        _
      %p1582 = scmp.le.s32.totalorder 2, %s12
      // Predicated region
      $region37: #{tpu_custom_call.1} parent=5 // pred_check
        %p1583 = pneg %p1582
      $region38: #{tpu_custom_call.1} parent=5 // pred_check_branch
        %1585 = sbr.rel (%p1583) target = $region40
      $region39: #{tpu_custom_call.1} parent=5 // pred_region
        %s1586 = ssub.s32 %s12, 2
        // Predicated region
        $region41: #{tpu_custom_call.1} parent=39 // pred_check
          %p1587 = pneg %p88
        $region42: #{tpu_custom_call.1} parent=39 // pred_check_branch
          %1589 = sbr.rel (%p1587) target = $region44
        $region43: #{tpu_custom_call.1} parent=39 // pred_region
          %s1590 = sand.u32 %s73, 1
          %s1591 = scalar_lea.sflag [#allocation4], %s1590
          %s1592 = sand.u32 %s73, 1
          %s1593 = smul.addr %s1592, 32
          %s1594 = scalar_lea.vmem [#allocation5], %s1593
          %1595 = dma.done %s1591, 512
        $region44: #{tpu_custom_call.1} parent=39 // pred_fallthru
          _
      $region40: #{tpu_custom_call.1} parent=5 // pred_fallthru
        _
    $region6: #{tpu_custom_call.1} parent=1 // loop_footer
      %s16 = sadd.s32 1, %s12
    $region7: #{tpu_custom_call.1} parent=1 // loop_footer_branch
      %11 = sbr.rel target = $region3
    $region8: #{tpu_custom_call.1} parent=1 // loop_exit
      _
    %1596 = vsyncpa [#allocation3], 1
    %s1597 = scalar_lea.sflag [#allocation3], 1
    %1598 = vsyncpa %s1597, 1
    %1599 = vsyncpa [#allocation4], 1
    %s1600 = scalar_lea.sflag [#allocation4], 1
    %1601 = vsyncpa %s1600, 1

</llo_original>
